<compile_context>
chip_gen: v7x
topology: tpu7x:2x2x1
jax: 0.10.0
libtpu: 0.0.40
codegen_flags: <defaults>
</compile_context>

<pallas_src>
import functools

import jax
import jax.numpy as jnp
from jax.experimental import pallas as pl
from jax.experimental.pallas import tpu as pltpu  # noqa: F401  (kept for TPU-specific tuning hooks)


# --------------------------- fused BN-folded GRU + conv kernel ---------------------------------
def _fused_gru_conv_kernel(x_ref, wih_ref, whh_ref, bi_ref, bhn_ref,
                           wconv_ref, bconv_ref, o_ref):
    # x_ref:     (T*M, C)    time-major rows: [t*M : (t+1)*M] is timestep t
    # wih_ref:   (C, 3H)     fused input->gate weights (r|z|n), BN pre-folded
    # whh_ref:   (H, 3H)     fused hidden->gate weights (r|z|n)
    # bi_ref:    (1, 3H)     [bih_r+bhh_r | bih_z+bhh_z | bih_n]  (BN pre-folded)
    # bhn_ref:   (1, H)      bhh_n (kept separate: it is multiplied by r)
    # wconv_ref: (T, H, 12)  per-timestep conv weight slice
    # bconv_ref: (1, 12)
    # o_ref:     (M, 12)
    TM, _ = x_ref.shape
    T, H, O = wconv_ref.shape
    M = TM // T

    # Input-side gate pre-activations for ALL timesteps in one MXU matmul,
    # off the serial recurrence critical path.
    gi_all = (
        jnp.dot(x_ref[...], wih_ref[...], preferred_element_type=jnp.float32)
        + bi_ref[...]
    )                                                       # (T*M, 3H)

    w_hh = whh_ref[...]
    b_hn = bhn_ref[...]
    w_conv = wconv_ref[...]

    # T is small and static: full unroll with static slices (the fully-unrolled
    # equivalent of lax.fori_loop(..., unroll=True), indices resolved at trace time).
    acc = jnp.zeros((M, O), jnp.float32)
    h = jnp.zeros((M, H), jnp.float32)
    for t in range(T):
        gi = gi_all[t * M:(t + 1) * M]                      # (M, 3H) static row slice
        if t == 0:
            # h == 0  =>  h @ Whh == 0: skip the hidden-side matmul.
            r = jax.nn.sigmoid(gi[:, :H])
            z = jax.nn.sigmoid(gi[:, H:2 * H])
            n = jnp.tanh(gi[:, 2 * H:] + r * b_hn)
            h = (1.0 - z) * n
        else:
            gh = jnp.dot(h, w_hh, preferred_element_type=jnp.float32)   # (M, 3H)
            r = jax.nn.sigmoid(gi[:, :H] + gh[:, :H])
            z = jax.nn.sigmoid(gi[:, H:2 * H] + gh[:, H:2 * H])
            n = jnp.tanh(gi[:, 2 * H:] + r * (gh[:, 2 * H:] + b_hn))
            h = (1.0 - z) * n + z * h
        # Fused Conv2d(c_out, 12, kernel=(1, recent)) as a running accumulation.
        acc = acc + jnp.dot(h, w_conv[t], preferred_element_type=jnp.float32)

    o_ref[...] = acc + bconv_ref[...]


def fused_gru_conv(x_flat, w_ih, w_hh, b_i, b_hn, w_conv, b_conv):
    TM, C = x_flat.shape
    T, H, O = w_conv.shape
    M = TM // T
    return pl.pallas_call(
        _fused_gru_conv_kernel,
        out_shape=jax.ShapeDtypeStruct((M, O), jnp.float32),
        in_specs=[
            pl.BlockSpec((TM, C), lambda: (0, 0)),
            pl.BlockSpec((C, 3 * H), lambda: (0, 0)),
            pl.BlockSpec((H, 3 * H), lambda: (0, 0)),
            pl.BlockSpec((1, 3 * H), lambda: (0, 0)),
            pl.BlockSpec((1, H), lambda: (0, 0)),
            pl.BlockSpec((T, H, O), lambda: (0, 0, 0)),
            pl.BlockSpec((1, O), lambda: (0, 0)),
        ],
        out_specs=pl.BlockSpec((M, O), lambda: (0, 0)),
    )(x_flat, w_ih, w_hh, b_i, b_hn, w_conv, b_conv)


# ----------------------------------------- forward --------------------------------------------
@functools.partial(jax.jit, static_argnames=("c_out",))
def gru_module_forward(x_w, x_d, x_r, supports, params, *, c_out):
    del x_w, x_d  # unused in the torch forward
    B, C, N, T = x_r.shape
    H = c_out
    M = B * N

    # ---- BatchNorm2d(c_in, affine=False), training-mode batch statistics ----
    # xn = (x - mean) * rsqrt(var + eps) feeds straight into x @ Wih, so fold it:
    #   xn @ Wih_g = x @ (s * Wih_g) + (bih_g - (mean * s) @ Wih_g),  s = rsqrt(var + eps)
    mean = jnp.mean(x_r, axis=(0, 2, 3))                                  # (C,)
    var = jnp.mean((x_r - mean[None, :, None, None]) ** 2, axis=(0, 2, 3))
    s = jax.lax.rsqrt(var + 1e-5)                                         # (C,)

    wih, whh = params["wih"], params["whh"]          # (3, C, H), (3, H, H), r|z|n order
    bih, bhh = params["bih"], params["bhh"]          # (3, 1, H), (3, 1, H)

    wih_f = wih * s[None, :, None]                                        # (3, C, H)
    bih_f = bih[:, 0, :] - jnp.einsum("c,gch->gh", mean * s, wih)         # (3, H)

    # Fused gate weights, PyTorch (r, z, n) column-block order preserved.
    w_ih = jnp.transpose(wih_f, (1, 0, 2)).reshape(C, 3 * H)              # (C, 3H)
    w_hh = jnp.transpose(whh, (1, 0, 2)).reshape(H, 3 * H)                # (H, 3H)

    # Pre-folded biases: r/z hidden biases merge into the input bias; the n-gate
    # hidden bias stays separate because it is multiplied by r inside the kernel.
    b_i = jnp.concatenate(
        [bih_f[0] + bhh[0, 0], bih_f[1] + bhh[1, 0], bih_f[2]], axis=0
    )[None, :]                                                            # (1, 3H)
    b_hn = bhh[2]                                                         # (1, H)

    # Conv2d(H, 12, kernel=(1, T)) weight as per-timestep (H, 12) slices.
    w_conv = jnp.transpose(params["w_conv"], (2, 1, 0))                   # (T, H, 12)
    b_conv = params["b_conv"][None, :]                                    # (1, 12)

    # Time-major input rows: row t*M + m  <->  (timestep t, m = b*N + n).
    x_flat = jnp.transpose(x_r, (3, 0, 2, 1)).reshape(T * M, C)           # (T*M, C)

    out = fused_gru_conv(x_flat, w_ih, w_hh, b_i, b_hn, w_conv, b_conv)   # (M, 12)
    out = out.reshape(B, N, 12)               # == conv(...).squeeze().permute(0, 2, 1)
    return out, supports, supports


# --------------------------------------- pure-JAX reference ------------------------------------
def reference_forward(x_r, supports, params, c_out):
    B, C, N, T = x_r.shape
    H = c_out
    mean = x_r.mean(axis=(0, 2, 3), keepdims=True)
    var = ((x_r - mean) ** 2).mean(axis=(0, 2, 3), keepdims=True)
    xn = (x_r - mean) / jnp.sqrt(var + 1e-5)
    xs = jnp.transpose(xn, (0, 2, 3, 1)).reshape(B * N, T, C)
    h = jnp.zeros((B * N, H), jnp.float32)
    wih, whh, bih, bhh = params["wih"], params["whh"], params["bih"], params["bhh"]
    ys = []
    for t in range(T):
        x_t = xs[:, t, :]
        r = jax.nn.sigmoid(x_t @ wih[0] + bih[0] + h @ whh[0] + bhh[0])
        z = jax.nn.sigmoid(x_t @ wih[1] + bih[1] + h @ whh[1] + bhh[1])
        n = jnp.tanh(x_t @ wih[2] + bih[2] + r * (h @ whh[2] + bhh[2]))
        h = (1.0 - z) * n + z * h
        ys.append(h)
    y = jnp.stack(ys, axis=1).reshape(B, N, T, H)          # (B, N, T, H)
    yc = jnp.transpose(y, (0, 3, 1, 2))                    # (B, H, N, T)
    out = jnp.einsum("bcnt,oct->bon", yc, params["w_conv"]) + params["b_conv"][None, :, None]
    return jnp.transpose(out, (0, 2, 1)), supports, supports


# ------------------------------------------- main ----------------------------------------------
if __name__ == "__main__":
    B, c_in, num_nodes, c_out = 2, 4, 16, 32
    week, day, recent = 2, 2, 8
    T = recent

    key = jax.random.PRNGKey(0)
    keys = jax.random.split(key, 10)

    x_w = jax.random.normal(keys[0], (B, c_in, num_nodes, week), jnp.float32)
    x_d = jax.random.normal(keys[1], (B, c_in, num_nodes, day), jnp.float32)
    x_r = jax.random.normal(keys[2], (B, c_in, num_nodes, T), jnp.float32)
    supports = jax.random.normal(keys[3], (num_nodes, num_nodes), jnp.float32)

    # deterministic synthetic parameters (gate order r, z, n as in PyTorch nn.GRU)
    params = {
        "wih": 0.1 * jax.random.normal(keys[4], (3, c_in, c_out), jnp.float32),
        "whh": 0.1 * jax.random.normal(keys[5], (3, c_out, c_out), jnp.float32),
        "bih": 0.1 * jax.random.normal(keys[6], (3, 1, c_out), jnp.float32),
        "bhh": 0.1 * jax.random.normal(keys[7], (3, 1, c_out), jnp.float32),
        "w_conv": 0.1 * jax.random.normal(keys[8], (12, c_out, T), jnp.float32),
        "b_conv": 0.1 * jax.random.normal(keys[9], (12,), jnp.float32),
    }

    out, s1, s2 = gru_module_forward(x_w, x_d, x_r, supports, params, c_out=c_out)
    out = jax.block_until_ready(out)

    ref, _, _ = reference_forward(x_r, supports, params, c_out)
    assert out.shape == (B, num_nodes, 12), out.shape
    assert jnp.allclose(out, ref, atol=1e-2, rtol=1e-2), float(jnp.max(jnp.abs(out - ref)))

    print("KERNEL_OK")
</pallas_src>

<mosaic_0001>
module attributes {stable_mosaic.version = 11 : i64} {
  func.func @_fused_gru_conv_kernel(%arg0: memref<256x4xf32, #tpu.memory_space<vmem>>, %arg1: memref<4x96xf32, #tpu.memory_space<vmem>>, %arg2: memref<32x96xf32, #tpu.memory_space<vmem>>, %arg3: memref<1x96xf32, #tpu.memory_space<vmem>>, %arg4: memref<1x32xf32, #tpu.memory_space<vmem>>, %arg5: memref<8x32x12xf32, #tpu.memory_space<vmem>>, %arg6: memref<1x12xf32, #tpu.memory_space<vmem>>, %arg7: memref<32x12xf32, #tpu.memory_space<vmem>>) attributes {dimension_semantics = [], scalar_prefetch = 0 : i64, scratch_operands = 0 : i64, tpu.core_type = #tpu.core_type<tc>} {
    %c0 = arith.constant 0 : index
    %c0_0 = arith.constant 0 : index
    %0 = vector.load %arg0[%c0, %c0_0] : memref<256x4xf32, #tpu.memory_space<vmem>>, vector<256x4xf32>
    %c0_1 = arith.constant 0 : index
    %c0_2 = arith.constant 0 : index
    %1 = vector.load %arg1[%c0_1, %c0_2] : memref<4x96xf32, #tpu.memory_space<vmem>>, vector<4x96xf32>
    %cst = arith.constant dense<0.000000e+00> : vector<256x96xf32>
    %2 = tpu.matmul %0, %1, %cst {dimension_numbers = #tpu.dot_dimension_numbers<[1], [0], [0], [1], [0, 0, 1, 1], [], []>} : vector<256x4xf32>, vector<4x96xf32>, vector<256x96xf32> -> vector<256x96xf32>
    %c0_3 = arith.constant 0 : index
    %c0_4 = arith.constant 0 : index
    %3 = vector.load %arg3[%c0_3, %c0_4] : memref<1x96xf32, #tpu.memory_space<vmem>>, vector<1x96xf32>
    %4 = vector.broadcast %3 : vector<1x96xf32> to vector<256x96xf32>
    %5 = arith.addf %2, %4 : vector<256x96xf32>
    %c0_5 = arith.constant 0 : index
    %c0_6 = arith.constant 0 : index
    %6 = vector.load %arg2[%c0_5, %c0_6] : memref<32x96xf32, #tpu.memory_space<vmem>>, vector<32x96xf32>
    %c0_7 = arith.constant 0 : index
    %c0_8 = arith.constant 0 : index
    %7 = vector.load %arg4[%c0_7, %c0_8] : memref<1x32xf32, #tpu.memory_space<vmem>>, vector<1x32xf32>
    %c0_9 = arith.constant 0 : index
    %c0_10 = arith.constant 0 : index
    %c0_11 = arith.constant 0 : index
    %8 = vector.load %arg5[%c0_9, %c0_10, %c0_11] : memref<8x32x12xf32, #tpu.memory_space<vmem>>, vector<8x32x12xf32>
    %cst_12 = arith.constant 0.000000e+00 : f32
    %9 = vector.broadcast %cst_12 : f32 to vector<32x12xf32>
    %10 = vector.extract_strided_slice %5 {offsets = [0, 0], sizes = [32, 96], strides = [1, 1]} : vector<256x96xf32> to vector<32x96xf32>
    %11 = vector.extract_strided_slice %10 {offsets = [0, 0], sizes = [32, 32], strides = [1, 1]} : vector<32x96xf32> to vector<32x32xf32>
    %12 = arith.negf %11 : vector<32x32xf32>
    %13 = math.exp %12 : vector<32x32xf32>
    %cst_13 = arith.constant 1.000000e+00 : f32
    %14 = vector.broadcast %cst_13 : f32 to vector<32x32xf32>
    %15 = arith.addf %14, %13 : vector<32x32xf32>
    %16 = arith.divf %14, %15 : vector<32x32xf32>
    %17 = vector.extract_strided_slice %10 {offsets = [0, 32], sizes = [32, 32], strides = [1, 1]} : vector<32x96xf32> to vector<32x32xf32>
    %18 = arith.negf %17 : vector<32x32xf32>
    %19 = math.exp %18 : vector<32x32xf32>
    %cst_14 = arith.constant 1.000000e+00 : f32
    %20 = vector.broadcast %cst_14 : f32 to vector<32x32xf32>
    %21 = arith.addf %20, %19 : vector<32x32xf32>
    %22 = arith.divf %20, %21 : vector<32x32xf32>
    %23 = vector.extract_strided_slice %10 {offsets = [0, 64], sizes = [32, 32], strides = [1, 1]} : vector<32x96xf32> to vector<32x32xf32>
    %24 = vector.broadcast %7 : vector<1x32xf32> to vector<32x32xf32>
    %25 = arith.mulf %16, %24 : vector<32x32xf32>
    %26 = arith.addf %23, %25 : vector<32x32xf32>
    %27 = math.tanh %26 : vector<32x32xf32>
    %cst_15 = arith.constant 1.000000e+00 : f32
    %28 = vector.broadcast %cst_15 : f32 to vector<32x32xf32>
    %29 = arith.subf %28, %22 : vector<32x32xf32>
    %30 = arith.mulf %29, %27 : vector<32x32xf32>
    %31 = vector.extract_strided_slice %8 {offsets = [0, 0, 0], sizes = [1, 32, 12], strides = [1, 1, 1]} : vector<8x32x12xf32> to vector<1x32x12xf32>
    %32 = vector.shape_cast %31 : vector<1x32x12xf32> to vector<32x12xf32>
    %cst_16 = arith.constant dense<0.000000e+00> : vector<32x12xf32>
    %33 = tpu.matmul %30, %32, %cst_16 {dimension_numbers = #tpu.dot_dimension_numbers<[1], [0], [0], [1], [0, 0, 1, 1], [], []>} : vector<32x32xf32>, vector<32x12xf32>, vector<32x12xf32> -> vector<32x12xf32>
    %34 = arith.addf %9, %33 : vector<32x12xf32>
    %35 = vector.extract_strided_slice %5 {offsets = [32, 0], sizes = [32, 96], strides = [1, 1]} : vector<256x96xf32> to vector<32x96xf32>
    %cst_17 = arith.constant dense<0.000000e+00> : vector<32x96xf32>
    %36 = tpu.matmul %30, %6, %cst_17 {dimension_numbers = #tpu.dot_dimension_numbers<[1], [0], [0], [1], [0, 0, 1, 1], [], []>} : vector<32x32xf32>, vector<32x96xf32>, vector<32x96xf32> -> vector<32x96xf32>
    %37 = vector.extract_strided_slice %35 {offsets = [0, 0], sizes = [32, 32], strides = [1, 1]} : vector<32x96xf32> to vector<32x32xf32>
    %38 = vector.extract_strided_slice %36 {offsets = [0, 0], sizes = [32, 32], strides = [1, 1]} : vector<32x96xf32> to vector<32x32xf32>
    %39 = arith.addf %37, %38 : vector<32x32xf32>
    %40 = arith.negf %39 : vector<32x32xf32>
    %41 = math.exp %40 : vector<32x32xf32>
    %cst_18 = arith.constant 1.000000e+00 : f32
    %42 = vector.broadcast %cst_18 : f32 to vector<32x32xf32>
    %43 = arith.addf %42, %41 : vector<32x32xf32>
    %44 = arith.divf %42, %43 : vector<32x32xf32>
    %45 = vector.extract_strided_slice %35 {offsets = [0, 32], sizes = [32, 32], strides = [1, 1]} : vector<32x96xf32> to vector<32x32xf32>
    %46 = vector.extract_strided_slice %36 {offsets = [0, 32], sizes = [32, 32], strides = [1, 1]} : vector<32x96xf32> to vector<32x32xf32>
    %47 = arith.addf %45, %46 : vector<32x32xf32>
    %48 = arith.negf %47 : vector<32x32xf32>
    %49 = math.exp %48 : vector<32x32xf32>
    %cst_19 = arith.constant 1.000000e+00 : f32
    %50 = vector.broadcast %cst_19 : f32 to vector<32x32xf32>
    %51 = arith.addf %50, %49 : vector<32x32xf32>
    %52 = arith.divf %50, %51 : vector<32x32xf32>
    %53 = vector.extract_strided_slice %35 {offsets = [0, 64], sizes = [32, 32], strides = [1, 1]} : vector<32x96xf32> to vector<32x32xf32>
    %54 = vector.extract_strided_slice %36 {offsets = [0, 64], sizes = [32, 32], strides = [1, 1]} : vector<32x96xf32> to vector<32x32xf32>
    %55 = vector.broadcast %7 : vector<1x32xf32> to vector<32x32xf32>
    %56 = arith.addf %54, %55 : vector<32x32xf32>
    %57 = arith.mulf %44, %56 : vector<32x32xf32>
    %58 = arith.addf %53, %57 : vector<32x32xf32>
    %59 = math.tanh %58 : vector<32x32xf32>
    %cst_20 = arith.constant 1.000000e+00 : f32
    %60 = vector.broadcast %cst_20 : f32 to vector<32x32xf32>
    %61 = arith.subf %60, %52 : vector<32x32xf32>
    %62 = arith.mulf %61, %59 : vector<32x32xf32>
    %63 = arith.mulf %52, %30 : vector<32x32xf32>
    %64 = arith.addf %62, %63 : vector<32x32xf32>
    %65 = vector.extract_strided_slice %8 {offsets = [1, 0, 0], sizes = [1, 32, 12], strides = [1, 1, 1]} : vector<8x32x12xf32> to vector<1x32x12xf32>
    %66 = vector.shape_cast %65 : vector<1x32x12xf32> to vector<32x12xf32>
    %cst_21 = arith.constant dense<0.000000e+00> : vector<32x12xf32>
    %67 = tpu.matmul %64, %66, %cst_21 {dimension_numbers = #tpu.dot_dimension_numbers<[1], [0], [0], [1], [0, 0, 1, 1], [], []>} : vector<32x32xf32>, vector<32x12xf32>, vector<32x12xf32> -> vector<32x12xf32>
    %68 = arith.addf %34, %67 : vector<32x12xf32>
    %69 = vector.extract_strided_slice %5 {offsets = [64, 0], sizes = [32, 96], strides = [1, 1]} : vector<256x96xf32> to vector<32x96xf32>
    %cst_22 = arith.constant dense<0.000000e+00> : vector<32x96xf32>
    %70 = tpu.matmul %64, %6, %cst_22 {dimension_numbers = #tpu.dot_dimension_numbers<[1], [0], [0], [1], [0, 0, 1, 1], [], []>} : vector<32x32xf32>, vector<32x96xf32>, vector<32x96xf32> -> vector<32x96xf32>
    %71 = vector.extract_strided_slice %69 {offsets = [0, 0], sizes = [32, 32], strides = [1, 1]} : vector<32x96xf32> to vector<32x32xf32>
    %72 = vector.extract_strided_slice %70 {offsets = [0, 0], sizes = [32, 32], strides = [1, 1]} : vector<32x96xf32> to vector<32x32xf32>
    %73 = arith.addf %71, %72 : vector<32x32xf32>
    %74 = arith.negf %73 : vector<32x32xf32>
    %75 = math.exp %74 : vector<32x32xf32>
    %cst_23 = arith.constant 1.000000e+00 : f32
    %76 = vector.broadcast %cst_23 : f32 to vector<32x32xf32>
    %77 = arith.addf %76, %75 : vector<32x32xf32>
    %78 = arith.divf %76, %77 : vector<32x32xf32>
    %79 = vector.extract_strided_slice %69 {offsets = [0, 32], sizes = [32, 32], strides = [1, 1]} : vector<32x96xf32> to vector<32x32xf32>
    %80 = vector.extract_strided_slice %70 {offsets = [0, 32], sizes = [32, 32], strides = [1, 1]} : vector<32x96xf32> to vector<32x32xf32>
    %81 = arith.addf %79, %80 : vector<32x32xf32>
    %82 = arith.negf %81 : vector<32x32xf32>
    %83 = math.exp %82 : vector<32x32xf32>
    %cst_24 = arith.constant 1.000000e+00 : f32
    %84 = vector.broadcast %cst_24 : f32 to vector<32x32xf32>
    %85 = arith.addf %84, %83 : vector<32x32xf32>
    %86 = arith.divf %84, %85 : vector<32x32xf32>
    %87 = vector.extract_strided_slice %69 {offsets = [0, 64], sizes = [32, 32], strides = [1, 1]} : vector<32x96xf32> to vector<32x32xf32>
    %88 = vector.extract_strided_slice %70 {offsets = [0, 64], sizes = [32, 32], strides = [1, 1]} : vector<32x96xf32> to vector<32x32xf32>
    %89 = vector.broadcast %7 : vector<1x32xf32> to vector<32x32xf32>
    %90 = arith.addf %88, %89 : vector<32x32xf32>
    %91 = arith.mulf %78, %90 : vector<32x32xf32>
    %92 = arith.addf %87, %91 : vector<32x32xf32>
    %93 = math.tanh %92 : vector<32x32xf32>
    %cst_25 = arith.constant 1.000000e+00 : f32
    %94 = vector.broadcast %cst_25 : f32 to vector<32x32xf32>
    %95 = arith.subf %94, %86 : vector<32x32xf32>
    %96 = arith.mulf %95, %93 : vector<32x32xf32>
    %97 = arith.mulf %86, %64 : vector<32x32xf32>
    %98 = arith.addf %96, %97 : vector<32x32xf32>
    %99 = vector.extract_strided_slice %8 {offsets = [2, 0, 0], sizes = [1, 32, 12], strides = [1, 1, 1]} : vector<8x32x12xf32> to vector<1x32x12xf32>
    %100 = vector.shape_cast %99 : vector<1x32x12xf32> to vector<32x12xf32>
    %cst_26 = arith.constant dense<0.000000e+00> : vector<32x12xf32>
    %101 = tpu.matmul %98, %100, %cst_26 {dimension_numbers = #tpu.dot_dimension_numbers<[1], [0], [0], [1], [0, 0, 1, 1], [], []>} : vector<32x32xf32>, vector<32x12xf32>, vector<32x12xf32> -> vector<32x12xf32>
    %102 = arith.addf %68, %101 : vector<32x12xf32>
    %103 = vector.extract_strided_slice %5 {offsets = [96, 0], sizes = [32, 96], strides = [1, 1]} : vector<256x96xf32> to vector<32x96xf32>
    %cst_27 = arith.constant dense<0.000000e+00> : vector<32x96xf32>
    %104 = tpu.matmul %98, %6, %cst_27 {dimension_numbers = #tpu.dot_dimension_numbers<[1], [0], [0], [1], [0, 0, 1, 1], [], []>} : vector<32x32xf32>, vector<32x96xf32>, vector<32x96xf32> -> vector<32x96xf32>
    %105 = vector.extract_strided_slice %103 {offsets = [0, 0], sizes = [32, 32], strides = [1, 1]} : vector<32x96xf32> to vector<32x32xf32>
    %106 = vector.extract_strided_slice %104 {offsets = [0, 0], sizes = [32, 32], strides = [1, 1]} : vector<32x96xf32> to vector<32x32xf32>
    %107 = arith.addf %105, %106 : vector<32x32xf32>
    %108 = arith.negf %107 : vector<32x32xf32>
    %109 = math.exp %108 : vector<32x32xf32>
    %cst_28 = arith.constant 1.000000e+00 : f32
    %110 = vector.broadcast %cst_28 : f32 to vector<32x32xf32>
    %111 = arith.addf %110, %109 : vector<32x32xf32>
    %112 = arith.divf %110, %111 : vector<32x32xf32>
    %113 = vector.extract_strided_slice %103 {offsets = [0, 32], sizes = [32, 32], strides = [1, 1]} : vector<32x96xf32> to vector<32x32xf32>
    %114 = vector.extract_strided_slice %104 {offsets = [0, 32], sizes = [32, 32], strides = [1, 1]} : vector<32x96xf32> to vector<32x32xf32>
    %115 = arith.addf %113, %114 : vector<32x32xf32>
    %116 = arith.negf %115 : vector<32x32xf32>
    %117 = math.exp %116 : vector<32x32xf32>
    %cst_29 = arith.constant 1.000000e+00 : f32
    %118 = vector.broadcast %cst_29 : f32 to vector<32x32xf32>
    %119 = arith.addf %118, %117 : vector<32x32xf32>
    %120 = arith.divf %118, %119 : vector<32x32xf32>
    %121 = vector.extract_strided_slice %103 {offsets = [0, 64], sizes = [32, 32], strides = [1, 1]} : vector<32x96xf32> to vector<32x32xf32>
    %122 = vector.extract_strided_slice %104 {offsets = [0, 64], sizes = [32, 32], strides = [1, 1]} : vector<32x96xf32> to vector<32x32xf32>
    %123 = vector.broadcast %7 : vector<1x32xf32> to vector<32x32xf32>
    %124 = arith.addf %122, %123 : vector<32x32xf32>
    %125 = arith.mulf %112, %124 : vector<32x32xf32>
    %126 = arith.addf %121, %125 : vector<32x32xf32>
    %127 = math.tanh %126 : vector<32x32xf32>
    %cst_30 = arith.constant 1.000000e+00 : f32
    %128 = vector.broadcast %cst_30 : f32 to vector<32x32xf32>
    %129 = arith.subf %128, %120 : vector<32x32xf32>
    %130 = arith.mulf %129, %127 : vector<32x32xf32>
    %131 = arith.mulf %120, %98 : vector<32x32xf32>
    %132 = arith.addf %130, %131 : vector<32x32xf32>
    %133 = vector.extract_strided_slice %8 {offsets = [3, 0, 0], sizes = [1, 32, 12], strides = [1, 1, 1]} : vector<8x32x12xf32> to vector<1x32x12xf32>
    %134 = vector.shape_cast %133 : vector<1x32x12xf32> to vector<32x12xf32>
    %cst_31 = arith.constant dense<0.000000e+00> : vector<32x12xf32>
    %135 = tpu.matmul %132, %134, %cst_31 {dimension_numbers = #tpu.dot_dimension_numbers<[1], [0], [0], [1], [0, 0, 1, 1], [], []>} : vector<32x32xf32>, vector<32x12xf32>, vector<32x12xf32> -> vector<32x12xf32>
    %136 = arith.addf %102, %135 : vector<32x12xf32>
    %137 = vector.extract_strided_slice %5 {offsets = [128, 0], sizes = [32, 96], strides = [1, 1]} : vector<256x96xf32> to vector<32x96xf32>
    %cst_32 = arith.constant dense<0.000000e+00> : vector<32x96xf32>
    %138 = tpu.matmul %132, %6, %cst_32 {dimension_numbers = #tpu.dot_dimension_numbers<[1], [0], [0], [1], [0, 0, 1, 1], [], []>} : vector<32x32xf32>, vector<32x96xf32>, vector<32x96xf32> -> vector<32x96xf32>
    %139 = vector.extract_strided_slice %137 {offsets = [0, 0], sizes = [32, 32], strides = [1, 1]} : vector<32x96xf32> to vector<32x32xf32>
    %140 = vector.extract_strided_slice %138 {offsets = [0, 0], sizes = [32, 32], strides = [1, 1]} : vector<32x96xf32> to vector<32x32xf32>
    %141 = arith.addf %139, %140 : vector<32x32xf32>
    %142 = arith.negf %141 : vector<32x32xf32>
    %143 = math.exp %142 : vector<32x32xf32>
    %cst_33 = arith.constant 1.000000e+00 : f32
    %144 = vector.broadcast %cst_33 : f32 to vector<32x32xf32>
    %145 = arith.addf %144, %143 : vector<32x32xf32>
    %146 = arith.divf %144, %145 : vector<32x32xf32>
    %147 = vector.extract_strided_slice %137 {offsets = [0, 32], sizes = [32, 32], strides = [1, 1]} : vector<32x96xf32> to vector<32x32xf32>
    %148 = vector.extract_strided_slice %138 {offsets = [0, 32], sizes = [32, 32], strides = [1, 1]} : vector<32x96xf32> to vector<32x32xf32>
    %149 = arith.addf %147, %148 : vector<32x32xf32>
    %150 = arith.negf %149 : vector<32x32xf32>
    %151 = math.exp %150 : vector<32x32xf32>
    %cst_34 = arith.constant 1.000000e+00 : f32
    %152 = vector.broadcast %cst_34 : f32 to vector<32x32xf32>
    %153 = arith.addf %152, %151 : vector<32x32xf32>
    %154 = arith.divf %152, %153 : vector<32x32xf32>
    %155 = vector.extract_strided_slice %137 {offsets = [0, 64], sizes = [32, 32], strides = [1, 1]} : vector<32x96xf32> to vector<32x32xf32>
    %156 = vector.extract_strided_slice %138 {offsets = [0, 64], sizes = [32, 32], strides = [1, 1]} : vector<32x96xf32> to vector<32x32xf32>
    %157 = vector.broadcast %7 : vector<1x32xf32> to vector<32x32xf32>
    %158 = arith.addf %156, %157 : vector<32x32xf32>
    %159 = arith.mulf %146, %158 : vector<32x32xf32>
    %160 = arith.addf %155, %159 : vector<32x32xf32>
    %161 = math.tanh %160 : vector<32x32xf32>
    %cst_35 = arith.constant 1.000000e+00 : f32
    %162 = vector.broadcast %cst_35 : f32 to vector<32x32xf32>
    %163 = arith.subf %162, %154 : vector<32x32xf32>
    %164 = arith.mulf %163, %161 : vector<32x32xf32>
    %165 = arith.mulf %154, %132 : vector<32x32xf32>
    %166 = arith.addf %164, %165 : vector<32x32xf32>
    %167 = vector.extract_strided_slice %8 {offsets = [4, 0, 0], sizes = [1, 32, 12], strides = [1, 1, 1]} : vector<8x32x12xf32> to vector<1x32x12xf32>
    %168 = vector.shape_cast %167 : vector<1x32x12xf32> to vector<32x12xf32>
    %cst_36 = arith.constant dense<0.000000e+00> : vector<32x12xf32>
    %169 = tpu.matmul %166, %168, %cst_36 {dimension_numbers = #tpu.dot_dimension_numbers<[1], [0], [0], [1], [0, 0, 1, 1], [], []>} : vector<32x32xf32>, vector<32x12xf32>, vector<32x12xf32> -> vector<32x12xf32>
    %170 = arith.addf %136, %169 : vector<32x12xf32>
    %171 = vector.extract_strided_slice %5 {offsets = [160, 0], sizes = [32, 96], strides = [1, 1]} : vector<256x96xf32> to vector<32x96xf32>
    %cst_37 = arith.constant dense<0.000000e+00> : vector<32x96xf32>
    %172 = tpu.matmul %166, %6, %cst_37 {dimension_numbers = #tpu.dot_dimension_numbers<[1], [0], [0], [1], [0, 0, 1, 1], [], []>} : vector<32x32xf32>, vector<32x96xf32>, vector<32x96xf32> -> vector<32x96xf32>
    %173 = vector.extract_strided_slice %171 {offsets = [0, 0], sizes = [32, 32], strides = [1, 1]} : vector<32x96xf32> to vector<32x32xf32>
    %174 = vector.extract_strided_slice %172 {offsets = [0, 0], sizes = [32, 32], strides = [1, 1]} : vector<32x96xf32> to vector<32x32xf32>
    %175 = arith.addf %173, %174 : vector<32x32xf32>
    %176 = arith.negf %175 : vector<32x32xf32>
    %177 = math.exp %176 : vector<32x32xf32>
    %cst_38 = arith.constant 1.000000e+00 : f32
    %178 = vector.broadcast %cst_38 : f32 to vector<32x32xf32>
    %179 = arith.addf %178, %177 : vector<32x32xf32>
    %180 = arith.divf %178, %179 : vector<32x32xf32>
    %181 = vector.extract_strided_slice %171 {offsets = [0, 32], sizes = [32, 32], strides = [1, 1]} : vector<32x96xf32> to vector<32x32xf32>
    %182 = vector.extract_strided_slice %172 {offsets = [0, 32], sizes = [32, 32], strides = [1, 1]} : vector<32x96xf32> to vector<32x32xf32>
    %183 = arith.addf %181, %182 : vector<32x32xf32>
    %184 = arith.negf %183 : vector<32x32xf32>
    %185 = math.exp %184 : vector<32x32xf32>
    %cst_39 = arith.constant 1.000000e+00 : f32
    %186 = vector.broadcast %cst_39 : f32 to vector<32x32xf32>
    %187 = arith.addf %186, %185 : vector<32x32xf32>
    %188 = arith.divf %186, %187 : vector<32x32xf32>
    %189 = vector.extract_strided_slice %171 {offsets = [0, 64], sizes = [32, 32], strides = [1, 1]} : vector<32x96xf32> to vector<32x32xf32>
    %190 = vector.extract_strided_slice %172 {offsets = [0, 64], sizes = [32, 32], strides = [1, 1]} : vector<32x96xf32> to vector<32x32xf32>
    %191 = vector.broadcast %7 : vector<1x32xf32> to vector<32x32xf32>
    %192 = arith.addf %190, %191 : vector<32x32xf32>
    %193 = arith.mulf %180, %192 : vector<32x32xf32>
    %194 = arith.addf %189, %193 : vector<32x32xf32>
    %195 = math.tanh %194 : vector<32x32xf32>
    %cst_40 = arith.constant 1.000000e+00 : f32
    %196 = vector.broadcast %cst_40 : f32 to vector<32x32xf32>
    %197 = arith.subf %196, %188 : vector<32x32xf32>
    %198 = arith.mulf %197, %195 : vector<32x32xf32>
    %199 = arith.mulf %188, %166 : vector<32x32xf32>
    %200 = arith.addf %198, %199 : vector<32x32xf32>
    %201 = vector.extract_strided_slice %8 {offsets = [5, 0, 0], sizes = [1, 32, 12], strides = [1, 1, 1]} : vector<8x32x12xf32> to vector<1x32x12xf32>
    %202 = vector.shape_cast %201 : vector<1x32x12xf32> to vector<32x12xf32>
    %cst_41 = arith.constant dense<0.000000e+00> : vector<32x12xf32>
    %203 = tpu.matmul %200, %202, %cst_41 {dimension_numbers = #tpu.dot_dimension_numbers<[1], [0], [0], [1], [0, 0, 1, 1], [], []>} : vector<32x32xf32>, vector<32x12xf32>, vector<32x12xf32> -> vector<32x12xf32>
    %204 = arith.addf %170, %203 : vector<32x12xf32>
    %205 = vector.extract_strided_slice %5 {offsets = [192, 0], sizes = [32, 96], strides = [1, 1]} : vector<256x96xf32> to vector<32x96xf32>
    %cst_42 = arith.constant dense<0.000000e+00> : vector<32x96xf32>
    %206 = tpu.matmul %200, %6, %cst_42 {dimension_numbers = #tpu.dot_dimension_numbers<[1], [0], [0], [1], [0, 0, 1, 1], [], []>} : vector<32x32xf32>, vector<32x96xf32>, vector<32x96xf32> -> vector<32x96xf32>
    %207 = vector.extract_strided_slice %205 {offsets = [0, 0], sizes = [32, 32], strides = [1, 1]} : vector<32x96xf32> to vector<32x32xf32>
    %208 = vector.extract_strided_slice %206 {offsets = [0, 0], sizes = [32, 32], strides = [1, 1]} : vector<32x96xf32> to vector<32x32xf32>
    %209 = arith.addf %207, %208 : vector<32x32xf32>
    %210 = arith.negf %209 : vector<32x32xf32>
    %211 = math.exp %210 : vector<32x32xf32>
    %cst_43 = arith.constant 1.000000e+00 : f32
    %212 = vector.broadcast %cst_43 : f32 to vector<32x32xf32>
    %213 = arith.addf %212, %211 : vector<32x32xf32>
    %214 = arith.divf %212, %213 : vector<32x32xf32>
    %215 = vector.extract_strided_slice %205 {offsets = [0, 32], sizes = [32, 32], strides = [1, 1]} : vector<32x96xf32> to vector<32x32xf32>
    %216 = vector.extract_strided_slice %206 {offsets = [0, 32], sizes = [32, 32], strides = [1, 1]} : vector<32x96xf32> to vector<32x32xf32>
    %217 = arith.addf %215, %216 : vector<32x32xf32>
    %218 = arith.negf %217 : vector<32x32xf32>
    %219 = math.exp %218 : vector<32x32xf32>
    %cst_44 = arith.constant 1.000000e+00 : f32
    %220 = vector.broadcast %cst_44 : f32 to vector<32x32xf32>
    %221 = arith.addf %220, %219 : vector<32x32xf32>
    %222 = arith.divf %220, %221 : vector<32x32xf32>
    %223 = vector.extract_strided_slice %205 {offsets = [0, 64], sizes = [32, 32], strides = [1, 1]} : vector<32x96xf32> to vector<32x32xf32>
    %224 = vector.extract_strided_slice %206 {offsets = [0, 64], sizes = [32, 32], strides = [1, 1]} : vector<32x96xf32> to vector<32x32xf32>
    %225 = vector.broadcast %7 : vector<1x32xf32> to vector<32x32xf32>
    %226 = arith.addf %224, %225 : vector<32x32xf32>
    %227 = arith.mulf %214, %226 : vector<32x32xf32>
    %228 = arith.addf %223, %227 : vector<32x32xf32>
    %229 = math.tanh %228 : vector<32x32xf32>
    %cst_45 = arith.constant 1.000000e+00 : f32
    %230 = vector.broadcast %cst_45 : f32 to vector<32x32xf32>
    %231 = arith.subf %230, %222 : vector<32x32xf32>
    %232 = arith.mulf %231, %229 : vector<32x32xf32>
    %233 = arith.mulf %222, %200 : vector<32x32xf32>
    %234 = arith.addf %232, %233 : vector<32x32xf32>
    %235 = vector.extract_strided_slice %8 {offsets = [6, 0, 0], sizes = [1, 32, 12], strides = [1, 1, 1]} : vector<8x32x12xf32> to vector<1x32x12xf32>
    %236 = vector.shape_cast %235 : vector<1x32x12xf32> to vector<32x12xf32>
    %cst_46 = arith.constant dense<0.000000e+00> : vector<32x12xf32>
    %237 = tpu.matmul %234, %236, %cst_46 {dimension_numbers = #tpu.dot_dimension_numbers<[1], [0], [0], [1], [0, 0, 1, 1], [], []>} : vector<32x32xf32>, vector<32x12xf32>, vector<32x12xf32> -> vector<32x12xf32>
    %238 = arith.addf %204, %237 : vector<32x12xf32>
    %239 = vector.extract_strided_slice %5 {offsets = [224, 0], sizes = [32, 96], strides = [1, 1]} : vector<256x96xf32> to vector<32x96xf32>
    %cst_47 = arith.constant dense<0.000000e+00> : vector<32x96xf32>
    %240 = tpu.matmul %234, %6, %cst_47 {dimension_numbers = #tpu.dot_dimension_numbers<[1], [0], [0], [1], [0, 0, 1, 1], [], []>} : vector<32x32xf32>, vector<32x96xf32>, vector<32x96xf32> -> vector<32x96xf32>
    %241 = vector.extract_strided_slice %239 {offsets = [0, 0], sizes = [32, 32], strides = [1, 1]} : vector<32x96xf32> to vector<32x32xf32>
    %242 = vector.extract_strided_slice %240 {offsets = [0, 0], sizes = [32, 32], strides = [1, 1]} : vector<32x96xf32> to vector<32x32xf32>
    %243 = arith.addf %241, %242 : vector<32x32xf32>
    %244 = arith.negf %243 : vector<32x32xf32>
    %245 = math.exp %244 : vector<32x32xf32>
    %cst_48 = arith.constant 1.000000e+00 : f32
    %246 = vector.broadcast %cst_48 : f32 to vector<32x32xf32>
    %247 = arith.addf %246, %245 : vector<32x32xf32>
    %248 = arith.divf %246, %247 : vector<32x32xf32>
    %249 = vector.extract_strided_slice %239 {offsets = [0, 32], sizes = [32, 32], strides = [1, 1]} : vector<32x96xf32> to vector<32x32xf32>
    %250 = vector.extract_strided_slice %240 {offsets = [0, 32], sizes = [32, 32], strides = [1, 1]} : vector<32x96xf32> to vector<32x32xf32>
    %251 = arith.addf %249, %250 : vector<32x32xf32>
    %252 = arith.negf %251 : vector<32x32xf32>
    %253 = math.exp %252 : vector<32x32xf32>
    %cst_49 = arith.constant 1.000000e+00 : f32
    %254 = vector.broadcast %cst_49 : f32 to vector<32x32xf32>
    %255 = arith.addf %254, %253 : vector<32x32xf32>
    %256 = arith.divf %254, %255 : vector<32x32xf32>
    %257 = vector.extract_strided_slice %239 {offsets = [0, 64], sizes = [32, 32], strides = [1, 1]} : vector<32x96xf32> to vector<32x32xf32>
    %258 = vector.extract_strided_slice %240 {offsets = [0, 64], sizes = [32, 32], strides = [1, 1]} : vector<32x96xf32> to vector<32x32xf32>
    %259 = vector.broadcast %7 : vector<1x32xf32> to vector<32x32xf32>
    %260 = arith.addf %258, %259 : vector<32x32xf32>
    %261 = arith.mulf %248, %260 : vector<32x32xf32>
    %262 = arith.addf %257, %261 : vector<32x32xf32>
    %263 = math.tanh %262 : vector<32x32xf32>
    %cst_50 = arith.constant 1.000000e+00 : f32
    %264 = vector.broadcast %cst_50 : f32 to vector<32x32xf32>
    %265 = arith.subf %264, %256 : vector<32x32xf32>
    %266 = arith.mulf %265, %263 : vector<32x32xf32>
    %267 = arith.mulf %256, %234 : vector<32x32xf32>
    %268 = arith.addf %266, %267 : vector<32x32xf32>
    %269 = vector.extract_strided_slice %8 {offsets = [7, 0, 0], sizes = [1, 32, 12], strides = [1, 1, 1]} : vector<8x32x12xf32> to vector<1x32x12xf32>
    %270 = vector.shape_cast %269 : vector<1x32x12xf32> to vector<32x12xf32>
    %cst_51 = arith.constant dense<0.000000e+00> : vector<32x12xf32>
    %271 = tpu.matmul %268, %270, %cst_51 {dimension_numbers = #tpu.dot_dimension_numbers<[1], [0], [0], [1], [0, 0, 1, 1], [], []>} : vector<32x32xf32>, vector<32x12xf32>, vector<32x12xf32> -> vector<32x12xf32>
    %272 = arith.addf %238, %271 : vector<32x12xf32>
    %c0_52 = arith.constant 0 : index
    %c0_53 = arith.constant 0 : index
    %273 = vector.load %arg6[%c0_52, %c0_53] : memref<1x12xf32, #tpu.memory_space<vmem>>, vector<1x12xf32>
    %274 = vector.broadcast %273 : vector<1x12xf32> to vector<32x12xf32>
    %275 = arith.addf %272, %274 : vector<32x12xf32>
    %c0_54 = arith.constant 0 : index
    %c0_55 = arith.constant 0 : index
    %276 = vector.load %arg7[%c0_54, %c0_55] : memref<32x12xf32, #tpu.memory_space<vmem>>, vector<32x12xf32>
    tpu.vector_store %arg7[%c0_54, %c0_55], %275 {strides = array<i32>} : memref<32x12xf32, #tpu.memory_space<vmem>>, vector<32x12xf32>,
    return
  }
}

</mosaic_0001>

<llo_original>
// kernel: gru_module_forward.1
$region0: #{gru_module_forward.1}
  #allocation0 [shape = 'u32[]', space=smem, size = 0x4, offset = 0x4, fixed_abs, tag = 'smem constant byte address 0x4 - core index']
  #allocation1 [shape = 'u32[144,128]{1,0:T(1,128)}', space=vmem, size = 0x12000, scoped, tag = 'internal scratch']
  %s0 = inlined_call_operand.vmem [shape: f32[256,4], index: 0, kind: input, shape index: {}]
  %s1 = inlined_call_operand.vmem [shape: f32[4,96], index: 1, kind: input, shape index: {}]
  %s2 = inlined_call_operand.vmem [shape: f32[32,96], index: 2, kind: input, shape index: {}]
  %s3 = inlined_call_operand.vmem [shape: f32[1,96], index: 3, kind: input, shape index: {}]
  %s4 = inlined_call_operand.vmem [shape: f32[1,32], index: 4, kind: input, shape index: {}]
  %s5 = inlined_call_operand.vmem [shape: f32[8,32,12], index: 5, kind: input, shape index: {}]
  %s6 = inlined_call_operand.vmem [shape: f32[1,12], index: 6, kind: input, shape index: {}]
  %s7 = inlined_call_operand.vmem [shape: f32[32,12], index: 7, kind: output, shape index: {}]
  %s8 = sld [smem:[#allocation0]]
  $region38: #{gru_module_forward.1} parent=0
    _
  %s10 = ssub.s32 1, %s8
  %s11 = scalar_select 0, %s10, %s8
  // Predicated region
  $region2: #{gru_module_forward.1} parent=0 // pred_check
    _
  $region3: #{gru_module_forward.1} parent=0 // pred_check_branch
    %13 = sbr.rel (0) target = $region5
  $region4: #{gru_module_forward.1} parent=0 // pred_region
    _
  $region5: #{gru_module_forward.1} parent=0 // pred_fallthru
    _
  // Predicated region
  $region6: #{gru_module_forward.1} parent=0 // pred_check
    _
  $region7: #{gru_module_forward.1} parent=0 // pred_check_branch
    %15 = sbr.rel (0) target = $region9
  $region8: #{gru_module_forward.1} parent=0 // pred_region
    _
  $region9: #{gru_module_forward.1} parent=0 // pred_fallthru
    _
  // Predicated region
  $region10: #{gru_module_forward.1} parent=0 // pred_check
    _
  $region11: #{gru_module_forward.1} parent=0 // pred_check_branch
    %17 = sbr.rel (0) target = $region13
  $region12: #{gru_module_forward.1} parent=0 // pred_region
    _
  $region13: #{gru_module_forward.1} parent=0 // pred_fallthru
    _
  // Predicated region
  $region14: #{gru_module_forward.1} parent=0 // pred_check
    _
  $region15: #{gru_module_forward.1} parent=0 // pred_check_branch
    %19 = sbr.rel (0) target = $region17
  $region16: #{gru_module_forward.1} parent=0 // pred_region
    _
  $region17: #{gru_module_forward.1} parent=0 // pred_fallthru
    _
  // Predicated region
  $region18: #{gru_module_forward.1} parent=0 // pred_check
    _
  $region19: #{gru_module_forward.1} parent=0 // pred_check_branch
    %21 = sbr.rel (0) target = $region21
  $region20: #{gru_module_forward.1} parent=0 // pred_region
    _
  $region21: #{gru_module_forward.1} parent=0 // pred_fallthru
    _
  // Predicated region
  $region22: #{gru_module_forward.1} parent=0 // pred_check
    _
  $region23: #{gru_module_forward.1} parent=0 // pred_check_branch
    %23 = sbr.rel (0) target = $region25
  $region24: #{gru_module_forward.1} parent=0 // pred_region
    _
  $region25: #{gru_module_forward.1} parent=0 // pred_fallthru
    _
  // Predicated region
  $region26: #{gru_module_forward.1} parent=0 // pred_check
    _
  $region27: #{gru_module_forward.1} parent=0 // pred_check_branch
    %25 = sbr.rel (0) target = $region29
  $region28: #{gru_module_forward.1} parent=0 // pred_region
    _
  $region29: #{gru_module_forward.1} parent=0 // pred_fallthru
    _
  %v26 = vld [vmem:[%s0] sm:$0xff]
  %v27 = vld [vmem:[%s0 + $0x8] sm:$0xff]
  %v28 = vld [vmem:[%s0 + $0x10] sm:$0xff]
  %v29 = vld [vmem:[%s0 + $0x18] sm:$0xff]
  %v30 = vld [vmem:[%s0 + $0x20] sm:$0xff]
  %v31 = vld [vmem:[%s0 + $0x28] sm:$0xff]
  %v32 = vld [vmem:[%s0 + $0x30] sm:$0xff]
  %v33 = vld [vmem:[%s0 + $0x38] sm:$0xff]
  %v34 = vld [vmem:[%s0 + $0x40] sm:$0xff]
  %v35 = vld [vmem:[%s0 + $0x48] sm:$0xff]
  %v36 = vld [vmem:[%s0 + $0x50] sm:$0xff]
  %v37 = vld [vmem:[%s0 + $0x58] sm:$0xff]
  %v38 = vld [vmem:[%s0 + $0x60] sm:$0xff]
  %v39 = vld [vmem:[%s0 + $0x68] sm:$0xff]
  %v40 = vld [vmem:[%s0 + $0x70] sm:$0xff]
  %v41 = vld [vmem:[%s0 + $0x78] sm:$0xff]
  %v42 = vld [vmem:[%s0 + $0x80] sm:$0xff]
  %v43 = vld [vmem:[%s0 + $0x88] sm:$0xff]
  %v44 = vld [vmem:[%s0 + $0x90] sm:$0xff]
  %v45 = vld [vmem:[%s0 + $0x98] sm:$0xff]
  %v46 = vld [vmem:[%s0 + $0xa0] sm:$0xff]
  %v47 = vld [vmem:[%s0 + $0xa8] sm:$0xff]
  %v48 = vld [vmem:[%s0 + $0xb0] sm:$0xff]
  %v49 = vld [vmem:[%s0 + $0xb8] sm:$0xff]
  %v50 = vld [vmem:[%s0 + $0xc0] sm:$0xff]
  %v51 = vld [vmem:[%s0 + $0xc8] sm:$0xff]
  %v52 = vld [vmem:[%s0 + $0xd0] sm:$0xff]
  %v53 = vld [vmem:[%s0 + $0xd8] sm:$0xff]
  %v54 = vld [vmem:[%s0 + $0xe0] sm:$0xff]
  %v55 = vld [vmem:[%s0 + $0xe8] sm:$0xff]
  %v56 = vld [vmem:[%s0 + $0xf0] sm:$0xff]
  %v57 = vld [vmem:[%s0 + $0xf8] sm:$0xff]
  %v58 = vld [vmem:[%s1] sm:$0xf]
  %v59 = vld [vmem:[%s3] sm:$0x1]
  %v61 = vlaneseq
  %v62 = vshrl.u32 %v61, 7
  %v63 = vsub.s32 0, %v62
  %v64 = vrot.slane %v59, %v63
  %vm66 = vcmask 31744
  %v68 = vsel %vm66, %v26, 0
  %v71 = vsel %vm66, %v27, 0
  %v74 = vsel %vm66, %v28, 0
  %v77 = vsel %vm66, %v29, 0
  %v80 = vsel %vm66, %v30, 0
  %v83 = vsel %vm66, %v31, 0
  %v86 = vsel %vm66, %v32, 0
  %v89 = vsel %vm66, %v33, 0
  %v92 = vsel %vm66, %v34, 0
  %v95 = vsel %vm66, %v35, 0
  %v98 = vsel %vm66, %v36, 0
  %v101 = vsel %vm66, %v37, 0
  %v104 = vsel %vm66, %v38, 0
  %v107 = vsel %vm66, %v39, 0
  %v110 = vsel %vm66, %v40, 0
  %v113 = vsel %vm66, %v41, 0
  %v116 = vsel %vm66, %v42, 0
  %v119 = vsel %vm66, %v43, 0
  %v122 = vsel %vm66, %v44, 0
  %v125 = vsel %vm66, %v45, 0
  %v128 = vsel %vm66, %v46, 0
  %v131 = vsel %vm66, %v47, 0
  %v134 = vsel %vm66, %v48, 0
  %v137 = vsel %vm66, %v49, 0
  %v140 = vsel %vm66, %v50, 0
  %v143 = vsel %vm66, %v51, 0
  %v146 = vsel %vm66, %v52, 0
  %v149 = vsel %vm66, %v53, 0
  %v152 = vsel %vm66, %v54, 0
  %v155 = vsel %vm66, %v55, 0
  %v158 = vsel %vm66, %v56, 0
  %v161 = vsel %vm66, %v57, 0
  %vm163 = vcmask 1043456
  %v165 = vsel %vm163, %v58, 0
  %167 = vmatprep.subr.mxu0 0.0
  %168 = vmatpush1.msra.mxu0 %v165
  %169 = vmatprep.subr.mxu0 0.0
  %170 = vmatpush1.msra.mxu0 0.0
  %171 = vmatprep.subr.mxu0 0.0
  %172 = vmatpush1.msra.mxu0 0.0
  %173 = vmatprep.subr.mxu0 0.0
  %174 = vmatpush1.msra.mxu0 0.0
  %175 = vmatprep.subr.mxu0 0.0
  %176 = vmatpush1.msra.mxu0 0.0
  %177 = vmatprep.subr.mxu0 0.0
  %178 = vmatpush1.msra.mxu0 0.0
  %179 = vmatprep.subr.mxu0 0.0
  %180 = vmatpush1.msra.mxu0 0.0
  %181 = vmatprep.subr.mxu0 0.0
  %182 = vmatpush1.msra.mxu0 0.0
  %183 = vmatprep.subr.mxu0 0.0
  %184 = vmatpush1.msra.mxu0 0.0
  %185 = vmatprep.subr.mxu0 0.0
  %186 = vmatpush1.msra.mxu0 0.0
  %187 = vmatprep.subr.mxu0 0.0
  %188 = vmatpush1.msra.mxu0 0.0
  %189 = vmatprep.subr.mxu0 0.0
  %190 = vmatpush1.msra.mxu0 0.0
  %191 = vmatprep.subr.mxu0 0.0
  %192 = vmatpush1.msra.mxu0 0.0
  %193 = vmatprep.subr.mxu0 0.0
  %194 = vmatpush1.msra.mxu0 0.0
  %195 = vmatprep.subr.mxu0 0.0
  %196 = vmatpush1.msra.mxu0 0.0
  %197 = vmatprep.subr.mxu0 0.0
  %198 = vmatpush1.msra.mxu0 0.0
  %199 = vmatprep.subr.mxu0 0.0
  %200 = vmatpush1.msra.mxu0 0.0
  %201 = vmatprep.subr.mxu0 0.0
  %202 = vmatpush1.msra.mxu0 0.0
  %203 = vmatprep.subr.mxu0 0.0
  %204 = vmatpush1.msra.mxu0 0.0
  %205 = vmatprep.subr.mxu0 0.0
  %206 = vmatpush1.msra.mxu0 0.0
  %207 = vmatprep.subr.mxu0 0.0
  %208 = vmatpush1.msra.mxu0 0.0
  %209 = vmatprep.subr.mxu0 0.0
  %210 = vmatpush1.msra.mxu0 0.0
  %211 = vmatprep.subr.mxu0 0.0
  %212 = vmatpush1.msra.mxu0 0.0
  %213 = vmatprep.subr.mxu0 0.0
  %214 = vmatpush1.msra.mxu0 0.0
  %215 = vmatprep.subr.mxu0 0.0
  %216 = vmatpush1.msra.mxu0 0.0
  %217 = vmatprep.subr.mxu0 0.0
  %218 = vmatpush1.msra.mxu0 0.0
  %219 = vmatprep.subr.mxu0 0.0
  %220 = vmatpush1.msra.mxu0 0.0
  %221 = vmatprep.subr.mxu0 0.0
  %222 = vmatpush1.msra.mxu0 0.0
  %223 = vmatprep.subr.mxu0 0.0
  %224 = vmatpush1.msra.mxu0 0.0
  %225 = vmatprep.subr.mxu0 0.0
  %226 = vmatpush1.msra.mxu0 0.0
  %227 = vmatprep.subr.mxu0 0.0
  %228 = vmatpush1.msra.mxu0 0.0
  %229 = vmatprep.subr.mxu0 0.0
  %230 = vmatpush1.msra.mxu0 0.0
  %231 = vmatprep.mubr.f32.mxu0 0.0
  %232 = vmatmul.mubr.f32.gmra.mrb[0].mxu0 %v68
  %v233 = vpop.f32.mrb[0].mxu0
  %v234 = vadd.f32 %v64, %v233
  %v235 = vpop.f32.mrb[0].mxu0
  %236 = vmatprep.mubr.f32.mxu0 0.0
  %237 = vmatmul.mubr.f32.gmra.mrb[0].mxu0 %v71
  %v238 = vpop.f32.mrb[0].mxu0
  %v239 = vadd.f32 %v64, %v238
  %v240 = vpop.f32.mrb[0].mxu0
  %241 = vmatprep.mubr.f32.mxu0 0.0
  %242 = vmatmul.mubr.f32.gmra.mrb[0].mxu0 %v74
  %v243 = vpop.f32.mrb[0].mxu0
  %v244 = vadd.f32 %v64, %v243
  %v245 = vpop.f32.mrb[0].mxu0
  %246 = vmatprep.mubr.f32.mxu0 0.0
  %247 = vmatmul.mubr.f32.gmra.mrb[0].mxu0 %v77
  %v248 = vpop.f32.mrb[0].mxu0
  %v249 = vadd.f32 %v64, %v248
  %v250 = vpop.f32.mrb[0].mxu0
  %251 = vmatprep.mubr.f32.mxu0 0.0
  %252 = vmatmul.mubr.f32.gmra.mrb[0].mxu0 %v80
  %v253 = vpop.f32.mrb[0].mxu0
  %v254 = vadd.f32 %v64, %v253
  %v255 = vpop.f32.mrb[0].mxu0
  %256 = vmatprep.mubr.f32.mxu0 0.0
  %257 = vmatmul.mubr.f32.gmra.mrb[0].mxu0 %v83
  %v258 = vpop.f32.mrb[0].mxu0
  %v259 = vadd.f32 %v64, %v258
  %v260 = vpop.f32.mrb[0].mxu0
  %261 = vmatprep.mubr.f32.mxu0 0.0
  %262 = vmatmul.mubr.f32.gmra.mrb[0].mxu0 %v86
  %v263 = vpop.f32.mrb[0].mxu0
  %v264 = vadd.f32 %v64, %v263
  %v265 = vpop.f32.mrb[0].mxu0
  %266 = vmatprep.mubr.f32.mxu0 0.0
  %267 = vmatmul.mubr.f32.gmra.mrb[0].mxu0 %v89
  %v268 = vpop.f32.mrb[0].mxu0
  %v269 = vadd.f32 %v64, %v268
  %v270 = vpop.f32.mrb[0].mxu0
  %271 = vmatprep.mubr.f32.mxu0 0.0
  %272 = vmatmul.mubr.f32.gmra.mrb[0].mxu0 %v92
  %v273 = vpop.f32.mrb[0].mxu0
  %v274 = vadd.f32 %v64, %v273
  %v275 = vpop.f32.mrb[0].mxu0
  %276 = vmatprep.mubr.f32.mxu0 0.0
  %277 = vmatmul.mubr.f32.gmra.mrb[0].mxu0 %v95
  %v278 = vpop.f32.mrb[0].mxu0
  %v279 = vadd.f32 %v64, %v278
  %v280 = vpop.f32.mrb[0].mxu0
  %281 = vmatprep.mubr.f32.mxu0 0.0
  %282 = vmatmul.mubr.f32.gmra.mrb[0].mxu0 %v98
  %v283 = vpop.f32.mrb[0].mxu0
  %v284 = vadd.f32 %v64, %v283
  %v285 = vpop.f32.mrb[0].mxu0
  %286 = vmatprep.mubr.f32.mxu0 0.0
  %287 = vmatmul.mubr.f32.gmra.mrb[0].mxu0 %v101
  %v288 = vpop.f32.mrb[0].mxu0
  %v289 = vadd.f32 %v64, %v288
  %v290 = vpop.f32.mrb[0].mxu0
  %291 = vmatprep.mubr.f32.mxu0 0.0
  %292 = vmatmul.mubr.f32.gmra.mrb[0].mxu0 %v104
  %v293 = vpop.f32.mrb[0].mxu0
  %v294 = vadd.f32 %v64, %v293
  %v295 = vpop.f32.mrb[0].mxu0
  %296 = vmatprep.mubr.f32.mxu0 0.0
  %297 = vmatmul.mubr.f32.gmra.mrb[0].mxu0 %v107
  %v298 = vpop.f32.mrb[0].mxu0
  %v299 = vadd.f32 %v64, %v298
  %v300 = vpop.f32.mrb[0].mxu0
  %301 = vmatprep.mubr.f32.mxu0 0.0
  %302 = vmatmul.mubr.f32.gmra.mrb[0].mxu0 %v110
  %v303 = vpop.f32.mrb[0].mxu0
  %v304 = vadd.f32 %v64, %v303
  %v305 = vpop.f32.mrb[0].mxu0
  %306 = vmatprep.mubr.f32.mxu0 0.0
  %307 = vmatmul.mubr.f32.gmra.mrb[0].mxu0 %v113
  %v308 = vpop.f32.mrb[0].mxu0
  %v309 = vadd.f32 %v64, %v308
  %v310 = vpop.f32.mrb[0].mxu0
  %311 = vmatprep.mubr.f32.mxu0 0.0
  %312 = vmatmul.mubr.f32.gmra.mrb[0].mxu0 %v116
  %v313 = vpop.f32.mrb[0].mxu0
  %v314 = vadd.f32 %v64, %v313
  %v315 = vpop.f32.mrb[0].mxu0
  %316 = vmatprep.mubr.f32.mxu0 0.0
  %317 = vmatmul.mubr.f32.gmra.mrb[0].mxu0 %v119
  %v318 = vpop.f32.mrb[0].mxu0
  %v319 = vadd.f32 %v64, %v318
  %v320 = vpop.f32.mrb[0].mxu0
  %321 = vmatprep.mubr.f32.mxu0 0.0
  %322 = vmatmul.mubr.f32.gmra.mrb[0].mxu0 %v122
  %v323 = vpop.f32.mrb[0].mxu0
  %v324 = vadd.f32 %v64, %v323
  %v325 = vpop.f32.mrb[0].mxu0
  %326 = vmatprep.mubr.f32.mxu0 0.0
  %327 = vmatmul.mubr.f32.gmra.mrb[0].mxu0 %v125
  %v328 = vpop.f32.mrb[0].mxu0
  %v329 = vadd.f32 %v64, %v328
  %v330 = vpop.f32.mrb[0].mxu0
  %331 = vmatprep.mubr.f32.mxu0 0.0
  %332 = vmatmul.mubr.f32.gmra.mrb[0].mxu0 %v128
  %v333 = vpop.f32.mrb[0].mxu0
  %v334 = vadd.f32 %v64, %v333
  %v335 = vpop.f32.mrb[0].mxu0
  %336 = vmatprep.mubr.f32.mxu0 0.0
  %337 = vmatmul.mubr.f32.gmra.mrb[0].mxu0 %v131
  %v338 = vpop.f32.mrb[0].mxu0
  %v339 = vadd.f32 %v64, %v338
  %v340 = vpop.f32.mrb[0].mxu0
  %341 = vmatprep.mubr.f32.mxu0 0.0
  %342 = vmatmul.mubr.f32.gmra.mrb[0].mxu0 %v134
  %v343 = vpop.f32.mrb[0].mxu0
  %v344 = vadd.f32 %v64, %v343
  %v345 = vpop.f32.mrb[0].mxu0
  %346 = vmatprep.mubr.f32.mxu0 0.0
  %347 = vmatmul.mubr.f32.gmra.mrb[0].mxu0 %v137
  %v348 = vpop.f32.mrb[0].mxu0
  %v349 = vadd.f32 %v64, %v348
  %v350 = vpop.f32.mrb[0].mxu0
  %351 = vmatprep.mubr.f32.mxu0 0.0
  %352 = vmatmul.mubr.f32.gmra.mrb[0].mxu0 %v140
  %v353 = vpop.f32.mrb[0].mxu0
  %v354 = vadd.f32 %v64, %v353
  %v355 = vpop.f32.mrb[0].mxu0
  %356 = vmatprep.mubr.f32.mxu0 0.0
  %357 = vmatmul.mubr.f32.gmra.mrb[0].mxu0 %v143
  %v358 = vpop.f32.mrb[0].mxu0
  %v359 = vadd.f32 %v64, %v358
  %v360 = vpop.f32.mrb[0].mxu0
  %361 = vmatprep.mubr.f32.mxu0 0.0
  %362 = vmatmul.mubr.f32.gmra.mrb[0].mxu0 %v146
  %v363 = vpop.f32.mrb[0].mxu0
  %v364 = vadd.f32 %v64, %v363
  %v365 = vpop.f32.mrb[0].mxu0
  %366 = vmatprep.mubr.f32.mxu0 0.0
  %367 = vmatmul.mubr.f32.gmra.mrb[0].mxu0 %v149
  %v368 = vpop.f32.mrb[0].mxu0
  %v369 = vadd.f32 %v64, %v368
  %v370 = vpop.f32.mrb[0].mxu0
  %371 = vmatprep.mubr.f32.mxu0 0.0
  %372 = vmatmul.mubr.f32.gmra.mrb[0].mxu0 %v152
  %v373 = vpop.f32.mrb[0].mxu0
  %v374 = vadd.f32 %v64, %v373
  %v375 = vpop.f32.mrb[0].mxu0
  %376 = vmatprep.mubr.f32.mxu0 0.0
  %377 = vmatmul.mubr.f32.gmra.mrb[0].mxu0 %v155
  %v378 = vpop.f32.mrb[0].mxu0
  %v379 = vadd.f32 %v64, %v378
  %v380 = vpop.f32.mrb[0].mxu0
  %381 = vmatprep.mubr.f32.mxu0 0.0
  %382 = vmatmul.mubr.f32.gmra.mrb[0].mxu0 %v158
  %v383 = vpop.f32.mrb[0].mxu0
  %v384 = vadd.f32 %v64, %v383
  %v385 = vpop.f32.mrb[0].mxu0
  %386 = vmatprep.mubr.f32.mxu0 0.0
  %387 = vmatmul.mubr.f32.gmra.mrb[0].mxu0 %v161
  %v388 = vpop.f32.mrb[0].mxu0
  %v389 = vadd.f32 %v64, %v388
  %v390 = vpop.f32.mrb[0].mxu0
  %391 = vdwg.mxu0
  %v392 = vld [vmem:[%s2] sm:$0xff]
  %v393 = vld [vmem:[%s2 + $0x8] sm:$0xff]
  %v394 = vld [vmem:[%s2 + $0x10] sm:$0xff]
  %v395 = vld [vmem:[%s2 + $0x18] sm:$0xff]
  %v396 = vld [vmem:[%s4] sm:$0x1]
  %v397 = vld [vmem:[%s5] sm:$0xff]
  %v398 = vld [vmem:[%s5 + $0x8] sm:$0xff]
  %v399 = vld [vmem:[%s5 + $0x10] sm:$0xff]
  %v400 = vld [vmem:[%s5 + $0x18] sm:$0xff]
  %v401 = vld [vmem:[%s5 + $0x20] sm:$0xff]
  %v402 = vld [vmem:[%s5 + $0x28] sm:$0xff]
  %v403 = vld [vmem:[%s5 + $0x30] sm:$0xff]
  %v404 = vld [vmem:[%s5 + $0x38] sm:$0xff]
  %v405 = vld [vmem:[%s5 + $0x40] sm:$0xff]
  %v406 = vld [vmem:[%s5 + $0x48] sm:$0xff]
  %v407 = vld [vmem:[%s5 + $0x50] sm:$0xff]
  %v408 = vld [vmem:[%s5 + $0x58] sm:$0xff]
  %v409 = vld [vmem:[%s5 + $0x60] sm:$0xff]
  %v410 = vld [vmem:[%s5 + $0x68] sm:$0xff]
  %v411 = vld [vmem:[%s5 + $0x70] sm:$0xff]
  %v412 = vld [vmem:[%s5 + $0x78] sm:$0xff]
  %v413 = vld [vmem:[%s5 + $0x80] sm:$0xff]
  %v414 = vld [vmem:[%s5 + $0x88] sm:$0xff]
  %v415 = vld [vmem:[%s5 + $0x90] sm:$0xff]
  %v416 = vld [vmem:[%s5 + $0x98] sm:$0xff]
  %v417 = vld [vmem:[%s5 + $0xa0] sm:$0xff]
  %v418 = vld [vmem:[%s5 + $0xa8] sm:$0xff]
  %v419 = vld [vmem:[%s5 + $0xb0] sm:$0xff]
  %v420 = vld [vmem:[%s5 + $0xb8] sm:$0xff]
  %v421 = vld [vmem:[%s5 + $0xc0] sm:$0xff]
  %v422 = vld [vmem:[%s5 + $0xc8] sm:$0xff]
  %v423 = vld [vmem:[%s5 + $0xd0] sm:$0xff]
  %v424 = vld [vmem:[%s5 + $0xd8] sm:$0xff]
  %v425 = vld [vmem:[%s5 + $0xe0] sm:$0xff]
  %v426 = vld [vmem:[%s5 + $0xe8] sm:$0xff]
  %v427 = vld [vmem:[%s5 + $0xf0] sm:$0xff]
  %v428 = vld [vmem:[%s5 + $0xf8] sm:$0xff]
  %v429 = vxor.u32 %v234, 2147483648
  %v430 = vxor.u32 %v239, 2147483648
  %v431 = vxor.u32 %v244, 2147483648
  %v432 = vxor.u32 %v249, 2147483648
  %v433 = vmul.f32 %v429, 1.442695
  %v434 = vpow.pop %v433
  %v435 = vmul.f32 %v430, 1.442695
  %v436 = vpow.pop %v435
  %v437 = vmul.f32 %v431, 1.442695
  %v438 = vpow.pop %v437
  %v439 = vmul.f32 %v432, 1.442695
  %v440 = vpow.pop %v439
  %v441 = vadd.f32 %v434, 1.0
  %v442 = vadd.f32 %v436, 1.0
  %v443 = vadd.f32 %v438, 1.0
  %v444 = vadd.f32 %v440, 1.0
  %v445 = vrcp.pop %v441
  %v446 = vmul.f32 1.0, %v445
  %v447 = vrcp.pop %v442
  %v448 = vmul.f32 1.0, %v447
  %v449 = vrcp.pop %v443
  %v450 = vmul.f32 1.0, %v449
  %v451 = vrcp.pop %v444
  %v452 = vmul.f32 1.0, %v451
  %v454 = vlaneseq
  %v455 = vshrl.u32 %v454, 7
  %v456 = vsub.s32 0, %v455
  %v457 = vrot.slane %v396, %v456
  %v459 = vmul.f32 %v446, %v457
  %v460 = vmul.f32 %v448, %v457
  %v461 = vmul.f32 %v450, %v457
  %v462 = vmul.f32 %v452, %v457
  %467 = vrot.lane.b32.xlu0 %v459, 64
  %v468 = vpop.permute.xlu0 %467
  %469 = vrot.lane.b32.xlu0 %v460, 64
  %v470 = vpop.permute.xlu0 %469
  %471 = vrot.lane.b32.xlu0 %v461, 64
  %v472 = vpop.permute.xlu0 %471
  %473 = vrot.lane.b32.xlu0 %v462, 64
  %v474 = vpop.permute.xlu0 %473
  %v479 = vadd.f32 %v234, %v468
  %v480 = vadd.f32 %v239, %v470
  %v481 = vadd.f32 %v244, %v472
  %v482 = vadd.f32 %v249, %v474
  %v483 = vtanh.pop %v479
  %v484 = vtanh.pop %v480
  %v485 = vtanh.pop %v481
  %v486 = vtanh.pop %v482
  %v487 = vsub.f32 1.0, %v446
  %v488 = vsub.f32 1.0, %v448
  %v489 = vsub.f32 1.0, %v450
  %v490 = vsub.f32 1.0, %v452
  %495 = vrot.lane.b32.xlu0 %v483, 96
  %v496 = vpop.permute.xlu0 %495
  %497 = vrot.lane.b32.xlu0 %v484, 96
  %v498 = vpop.permute.xlu0 %497
  %499 = vrot.lane.b32.xlu0 %v485, 96
  %v500 = vpop.permute.xlu0 %499
  %501 = vrot.lane.b32.xlu0 %v486, 96
  %v502 = vpop.permute.xlu0 %501
  %v507 = vmul.f32 %v487, %v496
  %v508 = vmul.f32 %v488, %v498
  %v509 = vmul.f32 %v489, %v500
  %v510 = vmul.f32 %v490, %v502
  %515 = vrot.lane.b32.xlu0 %v507, 96
  %v516 = vpop.permute.xlu0 %515
  %517 = vrot.lane.b32.xlu0 %v508, 96
  %v518 = vpop.permute.xlu0 %517
  %519 = vrot.lane.b32.xlu0 %v509, 96
  %v520 = vpop.permute.xlu0 %519
  %521 = vrot.lane.b32.xlu0 %v510, 96
  %v522 = vpop.permute.xlu0 %521
  %vm523 = vcmask 261120
  %v524 = vsel %vm523, %v516, 0
  %v526 = vsel %vm523, %v518, 0
  %v528 = vsel %vm523, %v520, 0
  %v530 = vsel %vm523, %v522, 0
  %532 = vmatprep.subr.mxu0 0.0
  %533 = vmatpush1.msra.mxu0 %v392
  %534 = vmatprep.subr.mxu0 0.0
  %535 = vmatpush1.msra.mxu0 %v393
  %536 = vmatprep.subr.mxu0 0.0
  %537 = vmatpush1.msra.mxu0 %v394
  %538 = vmatprep.subr.mxu0 0.0
  %539 = vmatpush1.msra.mxu0 %v395
  %540 = vmatprep.subr.mxu0 0.0
  %541 = vmatpush1.msra.mxu0 0.0
  %542 = vmatprep.subr.mxu0 0.0
  %543 = vmatpush1.msra.mxu0 0.0
  %544 = vmatprep.subr.mxu0 0.0
  %545 = vmatpush1.msra.mxu0 0.0
  %546 = vmatprep.subr.mxu0 0.0
  %547 = vmatpush1.msra.mxu0 0.0
  %548 = vmatprep.subr.mxu0 0.0
  %549 = vmatpush1.msra.mxu0 0.0
  %550 = vmatprep.subr.mxu0 0.0
  %551 = vmatpush1.msra.mxu0 0.0
  %552 = vmatprep.subr.mxu0 0.0
  %553 = vmatpush1.msra.mxu0 0.0
  %554 = vmatprep.subr.mxu0 0.0
  %555 = vmatpush1.msra.mxu0 0.0
  %556 = vmatprep.subr.mxu0 0.0
  %557 = vmatpush1.msra.mxu0 0.0
  %558 = vmatprep.subr.mxu0 0.0
  %559 = vmatpush1.msra.mxu0 0.0
  %560 = vmatprep.subr.mxu0 0.0
  %561 = vmatpush1.msra.mxu0 0.0
  %562 = vmatprep.subr.mxu0 0.0
  %563 = vmatpush1.msra.mxu0 0.0
  %564 = vmatprep.subr.mxu0 0.0
  %565 = vmatpush1.msra.mxu0 0.0
  %566 = vmatprep.subr.mxu0 0.0
  %567 = vmatpush1.msra.mxu0 0.0
  %568 = vmatprep.subr.mxu0 0.0
  %569 = vmatpush1.msra.mxu0 0.0
  %570 = vmatprep.subr.mxu0 0.0
  %571 = vmatpush1.msra.mxu0 0.0
  %572 = vmatprep.subr.mxu0 0.0
  %573 = vmatpush1.msra.mxu0 0.0
  %574 = vmatprep.subr.mxu0 0.0
  %575 = vmatpush1.msra.mxu0 0.0
  %576 = vmatprep.subr.mxu0 0.0
  %577 = vmatpush1.msra.mxu0 0.0
  %578 = vmatprep.subr.mxu0 0.0
  %579 = vmatpush1.msra.mxu0 0.0
  %580 = vmatprep.subr.mxu0 0.0
  %581 = vmatpush1.msra.mxu0 0.0
  %582 = vmatprep.subr.mxu0 0.0
  %583 = vmatpush1.msra.mxu0 0.0
  %584 = vmatprep.subr.mxu0 0.0
  %585 = vmatpush1.msra.mxu0 0.0
  %586 = vmatprep.subr.mxu0 0.0
  %587 = vmatpush1.msra.mxu0 0.0
  %588 = vmatprep.subr.mxu0 0.0
  %589 = vmatpush1.msra.mxu0 0.0
  %590 = vmatprep.subr.mxu0 0.0
  %591 = vmatpush1.msra.mxu0 0.0
  %592 = vmatprep.subr.mxu0 0.0
  %593 = vmatpush1.msra.mxu0 0.0
  %594 = vmatprep.subr.mxu0 0.0
  %595 = vmatpush1.msra.mxu0 0.0
  %596 = vmatprep.mubr.f32.mxu0 0.0
  %597 = vmatmul.mubr.f32.gmra.mrb[0].mxu0 %v524
  %v598 = vpop.f32.mrb[0].mxu0
  %v599 = vadd.f32 0.0, %v598
  %v600 = vpop.f32.mrb[0].mxu0
  %601 = vmatprep.mubr.f32.mxu0 0.0
  %602 = vmatmul.mubr.f32.gmra.mrb[0].mxu0 %v526
  %v603 = vpop.f32.mrb[0].mxu0
  %v604 = vadd.f32 0.0, %v603
  %v605 = vpop.f32.mrb[0].mxu0
  %606 = vmatprep.mubr.f32.mxu0 0.0
  %607 = vmatmul.mubr.f32.gmra.mrb[0].mxu0 %v528
  %v608 = vpop.f32.mrb[0].mxu0
  %v609 = vadd.f32 0.0, %v608
  %v610 = vpop.f32.mrb[0].mxu0
  %611 = vmatprep.mubr.f32.mxu0 0.0
  %612 = vmatmul.mubr.f32.gmra.mrb[0].mxu0 %v530
  %v613 = vpop.f32.mrb[0].mxu0
  %v614 = vadd.f32 0.0, %v613
  %v615 = vpop.f32.mrb[0].mxu0
  %616 = vdwg.mxu0
  %v617 = vadd.f32 %v254, %v599
  %v618 = vadd.f32 %v259, %v604
  %v619 = vadd.f32 %v264, %v609
  %v620 = vadd.f32 %v269, %v614
  %v621 = vxor.u32 %v617, 2147483648
  %v622 = vxor.u32 %v618, 2147483648
  %v623 = vxor.u32 %v619, 2147483648
  %v624 = vxor.u32 %v620, 2147483648
  %v625 = vmul.f32 %v621, 1.442695
  %v626 = vpow.pop %v625
  %v627 = vmul.f32 %v622, 1.442695
  %v628 = vpow.pop %v627
  %v629 = vmul.f32 %v623, 1.442695
  %v630 = vpow.pop %v629
  %v631 = vmul.f32 %v624, 1.442695
  %v632 = vpow.pop %v631
  %v633 = vadd.f32 %v626, 1.0
  %v634 = vadd.f32 %v628, 1.0
  %v635 = vadd.f32 %v630, 1.0
  %v636 = vadd.f32 %v632, 1.0
  %v637 = vrcp.pop %v633
  %v638 = vmul.f32 1.0, %v637
  %v639 = vrcp.pop %v634
  %v640 = vmul.f32 1.0, %v639
  %v641 = vrcp.pop %v635
  %v642 = vmul.f32 1.0, %v641
  %v643 = vrcp.pop %v636
  %v644 = vmul.f32 1.0, %v643
  %645 = vrot.lane.b32.xlu0 %v457, 64
  %v646 = vpop.permute.xlu0 %645
  %v648 = vadd.f32 %v599, %v646
  %v649 = vadd.f32 %v604, %v646
  %v650 = vadd.f32 %v609, %v646
  %v651 = vadd.f32 %v614, %v646
  %656 = vrot.lane.b32.xlu0 %v648, 64
  %v657 = vpop.permute.xlu0 %656
  %658 = vrot.lane.b32.xlu0 %v649, 64
  %v659 = vpop.permute.xlu0 %658
  %660 = vrot.lane.b32.xlu0 %v650, 64
  %v661 = vpop.permute.xlu0 %660
  %662 = vrot.lane.b32.xlu0 %v651, 64
  %v663 = vpop.permute.xlu0 %662
  %v668 = vmul.f32 %v638, %v657
  %v669 = vmul.f32 %v640, %v659
  %v670 = vmul.f32 %v642, %v661
  %v671 = vmul.f32 %v644, %v663
  %676 = vrot.lane.b32.xlu0 %v668, 64
  %v677 = vpop.permute.xlu0 %676
  %678 = vrot.lane.b32.xlu0 %v669, 64
  %v679 = vpop.permute.xlu0 %678
  %680 = vrot.lane.b32.xlu0 %v670, 64
  %v681 = vpop.permute.xlu0 %680
  %682 = vrot.lane.b32.xlu0 %v671, 64
  %v683 = vpop.permute.xlu0 %682
  %v688 = vadd.f32 %v254, %v677
  %v689 = vadd.f32 %v259, %v679
  %v690 = vadd.f32 %v264, %v681
  %v691 = vadd.f32 %v269, %v683
  %v692 = vtanh.pop %v688
  %v693 = vtanh.pop %v689
  %v694 = vtanh.pop %v690
  %v695 = vtanh.pop %v691
  %v696 = vsub.f32 1.0, %v638
  %v697 = vsub.f32 1.0, %v640
  %v698 = vsub.f32 1.0, %v642
  %v699 = vsub.f32 1.0, %v644
  %704 = vrot.lane.b32.xlu0 %v692, 96
  %v705 = vpop.permute.xlu0 %704
  %706 = vrot.lane.b32.xlu0 %v693, 96
  %v707 = vpop.permute.xlu0 %706
  %708 = vrot.lane.b32.xlu0 %v694, 96
  %v709 = vpop.permute.xlu0 %708
  %710 = vrot.lane.b32.xlu0 %v695, 96
  %v711 = vpop.permute.xlu0 %710
  %v716 = vmul.f32 %v696, %v705
  %v717 = vmul.f32 %v697, %v707
  %v718 = vmul.f32 %v698, %v709
  %v719 = vmul.f32 %v699, %v711
  %v720 = vmul.f32 %v638, %v507
  %v721 = vmul.f32 %v640, %v508
  %v722 = vmul.f32 %v642, %v509
  %v723 = vmul.f32 %v644, %v510
  %v724 = vadd.f32 %v716, %v720
  %v725 = vadd.f32 %v717, %v721
  %v726 = vadd.f32 %v718, %v722
  %v727 = vadd.f32 %v719, %v723
  %732 = vrot.lane.b32.xlu0 %v724, 96
  %v733 = vpop.permute.xlu0 %732
  %734 = vrot.lane.b32.xlu0 %v725, 96
  %v735 = vpop.permute.xlu0 %734
  %736 = vrot.lane.b32.xlu0 %v726, 96
  %v737 = vpop.permute.xlu0 %736
  %738 = vrot.lane.b32.xlu0 %v727, 96
  %v739 = vpop.permute.xlu0 %738
  %v740 = vsel %vm523, %v733, 0
  %v742 = vsel %vm523, %v735, 0
  %v744 = vsel %vm523, %v737, 0
  %v746 = vsel %vm523, %v739, 0
  %748 = vmatprep.subr.mxu0 0.0
  %749 = vmatpush1.msra.mxu0 %v401
  %750 = vmatprep.subr.mxu0 0.0
  %751 = vmatpush1.msra.mxu0 %v402
  %752 = vmatprep.subr.mxu0 0.0
  %753 = vmatpush1.msra.mxu0 %v403
  %754 = vmatprep.subr.mxu0 0.0
  %755 = vmatpush1.msra.mxu0 %v404
  %756 = vmatprep.subr.mxu0 0.0
  %757 = vmatpush1.msra.mxu0 0.0
  %758 = vmatprep.subr.mxu0 0.0
  %759 = vmatpush1.msra.mxu0 0.0
  %760 = vmatprep.subr.mxu0 0.0
  %761 = vmatpush1.msra.mxu0 0.0
  %762 = vmatprep.subr.mxu0 0.0
  %763 = vmatpush1.msra.mxu0 0.0
  %764 = vmatprep.subr.mxu0 0.0
  %765 = vmatpush1.msra.mxu0 0.0
  %766 = vmatprep.subr.mxu0 0.0
  %767 = vmatpush1.msra.mxu0 0.0
  %768 = vmatprep.subr.mxu0 0.0
  %769 = vmatpush1.msra.mxu0 0.0
  %770 = vmatprep.subr.mxu0 0.0
  %771 = vmatpush1.msra.mxu0 0.0
  %772 = vmatprep.subr.mxu0 0.0
  %773 = vmatpush1.msra.mxu0 0.0
  %774 = vmatprep.subr.mxu0 0.0
  %775 = vmatpush1.msra.mxu0 0.0
  %776 = vmatprep.subr.mxu0 0.0
  %777 = vmatpush1.msra.mxu0 0.0
  %778 = vmatprep.subr.mxu0 0.0
  %779 = vmatpush1.msra.mxu0 0.0
  %780 = vmatprep.subr.mxu0 0.0
  %781 = vmatpush1.msra.mxu0 0.0
  %782 = vmatprep.subr.mxu0 0.0
  %783 = vmatpush1.msra.mxu0 0.0
  %784 = vmatprep.subr.mxu0 0.0
  %785 = vmatpush1.msra.mxu0 0.0
  %786 = vmatprep.subr.mxu0 0.0
  %787 = vmatpush1.msra.mxu0 0.0
  %788 = vmatprep.subr.mxu0 0.0
  %789 = vmatpush1.msra.mxu0 0.0
  %790 = vmatprep.subr.mxu0 0.0
  %791 = vmatpush1.msra.mxu0 0.0
  %792 = vmatprep.subr.mxu0 0.0
  %793 = vmatpush1.msra.mxu0 0.0
  %794 = vmatprep.subr.mxu0 0.0
  %795 = vmatpush1.msra.mxu0 0.0
  %796 = vmatprep.subr.mxu0 0.0
  %797 = vmatpush1.msra.mxu0 0.0
  %798 = vmatprep.subr.mxu0 0.0
  %799 = vmatpush1.msra.mxu0 0.0
  %800 = vmatprep.subr.mxu0 0.0
  %801 = vmatpush1.msra.mxu0 0.0
  %802 = vmatprep.subr.mxu0 0.0
  %803 = vmatpush1.msra.mxu0 0.0
  %804 = vmatprep.subr.mxu0 0.0
  %805 = vmatpush1.msra.mxu0 0.0
  %806 = vmatprep.subr.mxu0 0.0
  %807 = vmatpush1.msra.mxu0 0.0
  %808 = vmatprep.subr.mxu0 0.0
  %809 = vmatpush1.msra.mxu0 0.0
  %810 = vmatprep.subr.mxu0 0.0
  %811 = vmatpush1.msra.mxu0 0.0
  %812 = vmatprep.mubr.f32.mxu0 0.0
  %813 = vmatmul.mubr.f32.gmra.mrb[0].mxu0 %v740
  %v814 = vpop.f32.mrb[0].mxu0
  %v815 = vadd.f32 0.0, %v814
  %v816 = vpop.f32.mrb[0].mxu0
  %817 = vmatprep.mubr.f32.mxu0 0.0
  %818 = vmatmul.mubr.f32.gmra.mrb[0].mxu0 %v742
  %v819 = vpop.f32.mrb[0].mxu0
  %v820 = vadd.f32 0.0, %v819
  %v821 = vpop.f32.mrb[0].mxu0
  %822 = vmatprep.mubr.f32.mxu0 0.0
  %823 = vmatmul.mubr.f32.gmra.mrb[0].mxu0 %v744
  %v824 = vpop.f32.mrb[0].mxu0
  %v825 = vadd.f32 0.0, %v824
  %v826 = vpop.f32.mrb[0].mxu0
  %827 = vmatprep.mubr.f32.mxu0 0.0
  %828 = vmatmul.mubr.f32.gmra.mrb[0].mxu0 %v746
  %v829 = vpop.f32.mrb[0].mxu0
  %v830 = vadd.f32 0.0, %v829
  %v831 = vpop.f32.mrb[0].mxu0
  %832 = vdwg.mxu0
  %833 = vmatprep.subr.mxu0 0.0
  %834 = vmatpush1.msra.mxu0 %v397
  %835 = vmatprep.subr.mxu0 0.0
  %836 = vmatpush1.msra.mxu0 %v398
  %837 = vmatprep.subr.mxu0 0.0
  %838 = vmatpush1.msra.mxu0 %v399
  %839 = vmatprep.subr.mxu0 0.0
  %840 = vmatpush1.msra.mxu0 %v400
  %841 = vmatprep.subr.mxu0 0.0
  %842 = vmatpush1.msra.mxu0 0.0
  %843 = vmatprep.subr.mxu0 0.0
  %844 = vmatpush1.msra.mxu0 0.0
  %845 = vmatprep.subr.mxu0 0.0
  %846 = vmatpush1.msra.mxu0 0.0
  %847 = vmatprep.subr.mxu0 0.0
  %848 = vmatpush1.msra.mxu0 0.0
  %849 = vmatprep.subr.mxu0 0.0
  %850 = vmatpush1.msra.mxu0 0.0
  %851 = vmatprep.subr.mxu0 0.0
  %852 = vmatpush1.msra.mxu0 0.0
  %853 = vmatprep.subr.mxu0 0.0
  %854 = vmatpush1.msra.mxu0 0.0
  %855 = vmatprep.subr.mxu0 0.0
  %856 = vmatpush1.msra.mxu0 0.0
  %857 = vmatprep.subr.mxu0 0.0
  %858 = vmatpush1.msra.mxu0 0.0
  %859 = vmatprep.subr.mxu0 0.0
  %860 = vmatpush1.msra.mxu0 0.0
  %861 = vmatprep.subr.mxu0 0.0
  %862 = vmatpush1.msra.mxu0 0.0
  %863 = vmatprep.subr.mxu0 0.0
  %864 = vmatpush1.msra.mxu0 0.0
  %865 = vmatprep.subr.mxu0 0.0
  %866 = vmatpush1.msra.mxu0 0.0
  %867 = vmatprep.subr.mxu0 0.0
  %868 = vmatpush1.msra.mxu0 0.0
  %869 = vmatprep.subr.mxu0 0.0
  %870 = vmatpush1.msra.mxu0 0.0
  %871 = vmatprep.subr.mxu0 0.0
  %872 = vmatpush1.msra.mxu0 0.0
  %873 = vmatprep.subr.mxu0 0.0
  %874 = vmatpush1.msra.mxu0 0.0
  %875 = vmatprep.subr.mxu0 0.0
  %876 = vmatpush1.msra.mxu0 0.0
  %877 = vmatprep.subr.mxu0 0.0
  %878 = vmatpush1.msra.mxu0 0.0
  %879 = vmatprep.subr.mxu0 0.0
  %880 = vmatpush1.msra.mxu0 0.0
  %881 = vmatprep.subr.mxu0 0.0
  %882 = vmatpush1.msra.mxu0 0.0
  %883 = vmatprep.subr.mxu0 0.0
  %884 = vmatpush1.msra.mxu0 0.0
  %885 = vmatprep.subr.mxu0 0.0
  %886 = vmatpush1.msra.mxu0 0.0
  %887 = vmatprep.subr.mxu0 0.0
  %888 = vmatpush1.msra.mxu0 0.0
  %889 = vmatprep.subr.mxu0 0.0
  %890 = vmatpush1.msra.mxu0 0.0
  %891 = vmatprep.subr.mxu0 0.0
  %892 = vmatpush1.msra.mxu0 0.0
  %893 = vmatprep.subr.mxu0 0.0
  %894 = vmatpush1.msra.mxu0 0.0
  %895 = vmatprep.subr.mxu0 0.0
  %896 = vmatpush1.msra.mxu0 0.0
  %897 = vmatprep.mubr.f32.mxu0 0.0
  %898 = vmatmul.mubr.f32.gmra.mrb[0].mxu0 %v524
  %v899 = vpop.f32.mrb[0].mxu0
  %v900 = vadd.f32 %v815, %v899
  %v901 = vpop.f32.mrb[0].mxu0
  %902 = vmatprep.mubr.f32.mxu0 0.0
  %903 = vmatmul.mubr.f32.gmra.mrb[0].mxu0 %v526
  %v904 = vpop.f32.mrb[0].mxu0
  %v905 = vadd.f32 %v820, %v904
  %v906 = vpop.f32.mrb[0].mxu0
  %907 = vmatprep.mubr.f32.mxu0 0.0
  %908 = vmatmul.mubr.f32.gmra.mrb[0].mxu0 %v528
  %v909 = vpop.f32.mrb[0].mxu0
  %v910 = vadd.f32 %v825, %v909
  %v911 = vpop.f32.mrb[0].mxu0
  %912 = vmatprep.mubr.f32.mxu0 0.0
  %913 = vmatmul.mubr.f32.gmra.mrb[0].mxu0 %v530
  %v914 = vpop.f32.mrb[0].mxu0
  %v915 = vadd.f32 %v830, %v914
  %v916 = vpop.f32.mrb[0].mxu0
  %917 = vdwg.mxu0
  %918 = vmatprep.subr.mxu0 0.0
  %919 = vmatpush1.msra.mxu0 %v392
  %920 = vmatprep.subr.mxu0 0.0
  %921 = vmatpush1.msra.mxu0 %v393
  %922 = vmatprep.subr.mxu0 0.0
  %923 = vmatpush1.msra.mxu0 %v394
  %924 = vmatprep.subr.mxu0 0.0
  %925 = vmatpush1.msra.mxu0 %v395
  %926 = vmatprep.subr.mxu0 0.0
  %927 = vmatpush1.msra.mxu0 0.0
  %928 = vmatprep.subr.mxu0 0.0
  %929 = vmatpush1.msra.mxu0 0.0
  %930 = vmatprep.subr.mxu0 0.0
  %931 = vmatpush1.msra.mxu0 0.0
  %932 = vmatprep.subr.mxu0 0.0
  %933 = vmatpush1.msra.mxu0 0.0
  %934 = vmatprep.subr.mxu0 0.0
  %935 = vmatpush1.msra.mxu0 0.0
  %936 = vmatprep.subr.mxu0 0.0
  %937 = vmatpush1.msra.mxu0 0.0
  %938 = vmatprep.subr.mxu0 0.0
  %939 = vmatpush1.msra.mxu0 0.0
  %940 = vmatprep.subr.mxu0 0.0
  %941 = vmatpush1.msra.mxu0 0.0
  %942 = vmatprep.subr.mxu0 0.0
  %943 = vmatpush1.msra.mxu0 0.0
  %944 = vmatprep.subr.mxu0 0.0
  %945 = vmatpush1.msra.mxu0 0.0
  %946 = vmatprep.subr.mxu0 0.0
  %947 = vmatpush1.msra.mxu0 0.0
  %948 = vmatprep.subr.mxu0 0.0
  %949 = vmatpush1.msra.mxu0 0.0
  %950 = vmatprep.subr.mxu0 0.0
  %951 = vmatpush1.msra.mxu0 0.0
  %952 = vmatprep.subr.mxu0 0.0
  %953 = vmatpush1.msra.mxu0 0.0
  %954 = vmatprep.subr.mxu0 0.0
  %955 = vmatpush1.msra.mxu0 0.0
  %956 = vmatprep.subr.mxu0 0.0
  %957 = vmatpush1.msra.mxu0 0.0
  %958 = vmatprep.subr.mxu0 0.0
  %959 = vmatpush1.msra.mxu0 0.0
  %960 = vmatprep.subr.mxu0 0.0
  %961 = vmatpush1.msra.mxu0 0.0
  %962 = vmatprep.subr.mxu0 0.0
  %963 = vmatpush1.msra.mxu0 0.0
  %964 = vmatprep.subr.mxu0 0.0
  %965 = vmatpush1.msra.mxu0 0.0
  %966 = vmatprep.subr.mxu0 0.0
  %967 = vmatpush1.msra.mxu0 0.0
  %968 = vmatprep.subr.mxu0 0.0
  %969 = vmatpush1.msra.mxu0 0.0
  %970 = vmatprep.subr.mxu0 0.0
  %971 = vmatpush1.msra.mxu0 0.0
  %972 = vmatprep.subr.mxu0 0.0
  %973 = vmatpush1.msra.mxu0 0.0
  %974 = vmatprep.subr.mxu0 0.0
  %975 = vmatpush1.msra.mxu0 0.0
  %976 = vmatprep.subr.mxu0 0.0
  %977 = vmatpush1.msra.mxu0 0.0
  %978 = vmatprep.subr.mxu0 0.0
  %979 = vmatpush1.msra.mxu0 0.0
  %980 = vmatprep.subr.mxu0 0.0
  %981 = vmatpush1.msra.mxu0 0.0
  %982 = vmatprep.mubr.f32.mxu0 0.0
  %983 = vmatmul.mubr.f32.gmra.mrb[0].mxu0 %v740
  %v984 = vpop.f32.mrb[0].mxu0
  %v985 = vadd.f32 0.0, %v984
  %v986 = vpop.f32.mrb[0].mxu0
  %987 = vmatprep.mubr.f32.mxu0 0.0
  %988 = vmatmul.mubr.f32.gmra.mrb[0].mxu0 %v742
  %v989 = vpop.f32.mrb[0].mxu0
  %v990 = vadd.f32 0.0, %v989
  %v991 = vpop.f32.mrb[0].mxu0
  %992 = vmatprep.mubr.f32.mxu0 0.0
  %993 = vmatmul.mubr.f32.gmra.mrb[0].mxu0 %v744
  %v994 = vpop.f32.mrb[0].mxu0
  %v995 = vadd.f32 0.0, %v994
  %v996 = vpop.f32.mrb[0].mxu0
  %997 = vmatprep.mubr.f32.mxu0 0.0
  %998 = vmatmul.mubr.f32.gmra.mrb[0].mxu0 %v746
  %v999 = vpop.f32.mrb[0].mxu0
  %v1000 = vadd.f32 0.0, %v999
  %v1001 = vpop.f32.mrb[0].mxu0
  %1002 = vdwg.mxu0
  %v1003 = vadd.f32 %v274, %v985
  %v1004 = vadd.f32 %v279, %v990
  %v1005 = vadd.f32 %v284, %v995
  %v1006 = vadd.f32 %v289, %v1000
  %v1007 = vxor.u32 %v1003, 2147483648
  %v1008 = vxor.u32 %v1004, 2147483648
  %v1009 = vxor.u32 %v1005, 2147483648
  %v1010 = vxor.u32 %v1006, 2147483648
  %v1011 = vmul.f32 %v1007, 1.442695
  %v1012 = vpow.pop %v1011
  %v1013 = vmul.f32 %v1008, 1.442695
  %v1014 = vpow.pop %v1013
  %v1015 = vmul.f32 %v1009, 1.442695
  %v1016 = vpow.pop %v1015
  %v1017 = vmul.f32 %v1010, 1.442695
  %v1018 = vpow.pop %v1017
  %v1019 = vadd.f32 %v1012, 1.0
  %v1020 = vadd.f32 %v1014, 1.0
  %v1021 = vadd.f32 %v1016, 1.0
  %v1022 = vadd.f32 %v1018, 1.0
  %v1023 = vrcp.pop %v1019
  %v1024 = vmul.f32 1.0, %v1023
  %v1025 = vrcp.pop %v1020
  %v1026 = vmul.f32 1.0, %v1025
  %v1027 = vrcp.pop %v1021
  %v1028 = vmul.f32 1.0, %v1027
  %v1029 = vrcp.pop %v1022
  %v1030 = vmul.f32 1.0, %v1029
  %v1031 = vadd.f32 %v985, %v646
  %v1032 = vadd.f32 %v990, %v646
  %v1033 = vadd.f32 %v995, %v646
  %v1034 = vadd.f32 %v1000, %v646
  %1039 = vrot.lane.b32.xlu0 %v1031, 64
  %v1040 = vpop.permute.xlu0 %1039
  %1041 = vrot.lane.b32.xlu0 %v1032, 64
  %v1042 = vpop.permute.xlu0 %1041
  %1043 = vrot.lane.b32.xlu0 %v1033, 64
  %v1044 = vpop.permute.xlu0 %1043
  %1045 = vrot.lane.b32.xlu0 %v1034, 64
  %v1046 = vpop.permute.xlu0 %1045
  %v1051 = vmul.f32 %v1024, %v1040
  %v1052 = vmul.f32 %v1026, %v1042
  %v1053 = vmul.f32 %v1028, %v1044
  %v1054 = vmul.f32 %v1030, %v1046
  %1059 = vrot.lane.b32.xlu0 %v1051, 64
  %v1060 = vpop.permute.xlu0 %1059
  %1061 = vrot.lane.b32.xlu0 %v1052, 64
  %v1062 = vpop.permute.xlu0 %1061
  %1063 = vrot.lane.b32.xlu0 %v1053, 64
  %v1064 = vpop.permute.xlu0 %1063
  %1065 = vrot.lane.b32.xlu0 %v1054, 64
  %v1066 = vpop.permute.xlu0 %1065
  %v1071 = vadd.f32 %v274, %v1060
  %v1072 = vadd.f32 %v279, %v1062
  %v1073 = vadd.f32 %v284, %v1064
  %v1074 = vadd.f32 %v289, %v1066
  %v1075 = vtanh.pop %v1071
  %v1076 = vtanh.pop %v1072
  %v1077 = vtanh.pop %v1073
  %v1078 = vtanh.pop %v1074
  %v1079 = vsub.f32 1.0, %v1024
  %v1080 = vsub.f32 1.0, %v1026
  %v1081 = vsub.f32 1.0, %v1028
  %v1082 = vsub.f32 1.0, %v1030
  %1087 = vrot.lane.b32.xlu0 %v1075, 96
  %v1088 = vpop.permute.xlu0 %1087
  %1089 = vrot.lane.b32.xlu0 %v1076, 96
  %v1090 = vpop.permute.xlu0 %1089
  %1091 = vrot.lane.b32.xlu0 %v1077, 96
  %v1092 = vpop.permute.xlu0 %1091
  %1093 = vrot.lane.b32.xlu0 %v1078, 96
  %v1094 = vpop.permute.xlu0 %1093
  %v1099 = vmul.f32 %v1079, %v1088
  %v1100 = vmul.f32 %v1080, %v1090
  %v1101 = vmul.f32 %v1081, %v1092
  %v1102 = vmul.f32 %v1082, %v1094
  %v1103 = vmul.f32 %v1024, %v724
  %v1104 = vmul.f32 %v1026, %v725
  %v1105 = vmul.f32 %v1028, %v726
  %v1106 = vmul.f32 %v1030, %v727
  %v1107 = vadd.f32 %v1099, %v1103
  %v1108 = vadd.f32 %v1100, %v1104
  %v1109 = vadd.f32 %v1101, %v1105
  %v1110 = vadd.f32 %v1102, %v1106
  %1115 = vrot.lane.b32.xlu0 %v1107, 96
  %v1116 = vpop.permute.xlu0 %1115
  %1117 = vrot.lane.b32.xlu0 %v1108, 96
  %v1118 = vpop.permute.xlu0 %1117
  %1119 = vrot.lane.b32.xlu0 %v1109, 96
  %v1120 = vpop.permute.xlu0 %1119
  %1121 = vrot.lane.b32.xlu0 %v1110, 96
  %v1122 = vpop.permute.xlu0 %1121
  %v1123 = vsel %vm523, %v1116, 0
  %v1125 = vsel %vm523, %v1118, 0
  %v1127 = vsel %vm523, %v1120, 0
  %v1129 = vsel %vm523, %v1122, 0
  %1131 = vmatprep.subr.mxu0 0.0
  %1132 = vmatpush1.msra.mxu0 %v405
  %1133 = vmatprep.subr.mxu0 0.0
  %1134 = vmatpush1.msra.mxu0 %v406
  %1135 = vmatprep.subr.mxu0 0.0
  %1136 = vmatpush1.msra.mxu0 %v407
  %1137 = vmatprep.subr.mxu0 0.0
  %1138 = vmatpush1.msra.mxu0 %v408
  %1139 = vmatprep.subr.mxu0 0.0
  %1140 = vmatpush1.msra.mxu0 0.0
  %1141 = vmatprep.subr.mxu0 0.0
  %1142 = vmatpush1.msra.mxu0 0.0
  %1143 = vmatprep.subr.mxu0 0.0
  %1144 = vmatpush1.msra.mxu0 0.0
  %1145 = vmatprep.subr.mxu0 0.0
  %1146 = vmatpush1.msra.mxu0 0.0
  %1147 = vmatprep.subr.mxu0 0.0
  %1148 = vmatpush1.msra.mxu0 0.0
  %1149 = vmatprep.subr.mxu0 0.0
  %1150 = vmatpush1.msra.mxu0 0.0
  %1151 = vmatprep.subr.mxu0 0.0
  %1152 = vmatpush1.msra.mxu0 0.0
  %1153 = vmatprep.subr.mxu0 0.0
  %1154 = vmatpush1.msra.mxu0 0.0
  %1155 = vmatprep.subr.mxu0 0.0
  %1156 = vmatpush1.msra.mxu0 0.0
  %1157 = vmatprep.subr.mxu0 0.0
  %1158 = vmatpush1.msra.mxu0 0.0
  %1159 = vmatprep.subr.mxu0 0.0
  %1160 = vmatpush1.msra.mxu0 0.0
  %1161 = vmatprep.subr.mxu0 0.0
  %1162 = vmatpush1.msra.mxu0 0.0
  %1163 = vmatprep.subr.mxu0 0.0
  %1164 = vmatpush1.msra.mxu0 0.0
  %1165 = vmatprep.subr.mxu0 0.0
  %1166 = vmatpush1.msra.mxu0 0.0
  %1167 = vmatprep.subr.mxu0 0.0
  %1168 = vmatpush1.msra.mxu0 0.0
  %1169 = vmatprep.subr.mxu0 0.0
  %1170 = vmatpush1.msra.mxu0 0.0
  %1171 = vmatprep.subr.mxu0 0.0
  %1172 = vmatpush1.msra.mxu0 0.0
  %1173 = vmatprep.subr.mxu0 0.0
  %1174 = vmatpush1.msra.mxu0 0.0
  %1175 = vmatprep.subr.mxu0 0.0
  %1176 = vmatpush1.msra.mxu0 0.0
  %1177 = vmatprep.subr.mxu0 0.0
  %1178 = vmatpush1.msra.mxu0 0.0
  %1179 = vmatprep.subr.mxu0 0.0
  %1180 = vmatpush1.msra.mxu0 0.0
  %1181 = vmatprep.subr.mxu0 0.0
  %1182 = vmatpush1.msra.mxu0 0.0
  %1183 = vmatprep.subr.mxu0 0.0
  %1184 = vmatpush1.msra.mxu0 0.0
  %1185 = vmatprep.subr.mxu0 0.0
  %1186 = vmatpush1.msra.mxu0 0.0
  %1187 = vmatprep.subr.mxu0 0.0
  %1188 = vmatpush1.msra.mxu0 0.0
  %1189 = vmatprep.subr.mxu0 0.0
  %1190 = vmatpush1.msra.mxu0 0.0
  %1191 = vmatprep.subr.mxu0 0.0
  %1192 = vmatpush1.msra.mxu0 0.0
  %1193 = vmatprep.subr.mxu0 0.0
  %1194 = vmatpush1.msra.mxu0 0.0
  %1195 = vmatprep.mubr.f32.mxu0 0.0
  %1196 = vmatmul.mubr.f32.gmra.mrb[0].mxu0 %v1123
  %v1197 = vpop.f32.mrb[0].mxu0
  %v1198 = vadd.f32 0.0, %v1197
  %v1199 = vpop.f32.mrb[0].mxu0
  %1200 = vmatprep.mubr.f32.mxu0 0.0
  %1201 = vmatmul.mubr.f32.gmra.mrb[0].mxu0 %v1125
  %v1202 = vpop.f32.mrb[0].mxu0
  %v1203 = vadd.f32 0.0, %v1202
  %v1204 = vpop.f32.mrb[0].mxu0
  %1205 = vmatprep.mubr.f32.mxu0 0.0
  %1206 = vmatmul.mubr.f32.gmra.mrb[0].mxu0 %v1127
  %v1207 = vpop.f32.mrb[0].mxu0
  %v1208 = vadd.f32 0.0, %v1207
  %v1209 = vpop.f32.mrb[0].mxu0
  %1210 = vmatprep.mubr.f32.mxu0 0.0
  %1211 = vmatmul.mubr.f32.gmra.mrb[0].mxu0 %v1129
  %v1212 = vpop.f32.mrb[0].mxu0
  %v1213 = vadd.f32 0.0, %v1212
  %v1214 = vpop.f32.mrb[0].mxu0
  %1215 = vdwg.mxu0
  %v1216 = vadd.f32 %v900, %v1198
  %v1217 = vadd.f32 %v905, %v1203
  %v1218 = vadd.f32 %v910, %v1208
  %v1219 = vadd.f32 %v915, %v1213
  %1220 = vmatprep.subr.mxu0 0.0
  %1221 = vmatpush1.msra.mxu0 %v392
  %1222 = vmatprep.subr.mxu0 0.0
  %1223 = vmatpush1.msra.mxu0 %v393
  %1224 = vmatprep.subr.mxu0 0.0
  %1225 = vmatpush1.msra.mxu0 %v394
  %1226 = vmatprep.subr.mxu0 0.0
  %1227 = vmatpush1.msra.mxu0 %v395
  %1228 = vmatprep.subr.mxu0 0.0
  %1229 = vmatpush1.msra.mxu0 0.0
  %1230 = vmatprep.subr.mxu0 0.0
  %1231 = vmatpush1.msra.mxu0 0.0
  %1232 = vmatprep.subr.mxu0 0.0
  %1233 = vmatpush1.msra.mxu0 0.0
  %1234 = vmatprep.subr.mxu0 0.0
  %1235 = vmatpush1.msra.mxu0 0.0
  %1236 = vmatprep.subr.mxu0 0.0
  %1237 = vmatpush1.msra.mxu0 0.0
  %1238 = vmatprep.subr.mxu0 0.0
  %1239 = vmatpush1.msra.mxu0 0.0
  %1240 = vmatprep.subr.mxu0 0.0
  %1241 = vmatpush1.msra.mxu0 0.0
  %1242 = vmatprep.subr.mxu0 0.0
  %1243 = vmatpush1.msra.mxu0 0.0
  %1244 = vmatprep.subr.mxu0 0.0
  %1245 = vmatpush1.msra.mxu0 0.0
  %1246 = vmatprep.subr.mxu0 0.0
  %1247 = vmatpush1.msra.mxu0 0.0
  %1248 = vmatprep.subr.mxu0 0.0
  %1249 = vmatpush1.msra.mxu0 0.0
  %1250 = vmatprep.subr.mxu0 0.0
  %1251 = vmatpush1.msra.mxu0 0.0
  %1252 = vmatprep.subr.mxu0 0.0
  %1253 = vmatpush1.msra.mxu0 0.0
  %1254 = vmatprep.subr.mxu0 0.0
  %1255 = vmatpush1.msra.mxu0 0.0
  %1256 = vmatprep.subr.mxu0 0.0
  %1257 = vmatpush1.msra.mxu0 0.0
  %1258 = vmatprep.subr.mxu0 0.0
  %1259 = vmatpush1.msra.mxu0 0.0
  %1260 = vmatprep.subr.mxu0 0.0
  %1261 = vmatpush1.msra.mxu0 0.0
  %1262 = vmatprep.subr.mxu0 0.0
  %1263 = vmatpush1.msra.mxu0 0.0
  %1264 = vmatprep.subr.mxu0 0.0
  %1265 = vmatpush1.msra.mxu0 0.0
  %1266 = vmatprep.subr.mxu0 0.0
  %1267 = vmatpush1.msra.mxu0 0.0
  %1268 = vmatprep.subr.mxu0 0.0
  %1269 = vmatpush1.msra.mxu0 0.0
  %1270 = vmatprep.subr.mxu0 0.0
  %1271 = vmatpush1.msra.mxu0 0.0
  %1272 = vmatprep.subr.mxu0 0.0
  %1273 = vmatpush1.msra.mxu0 0.0
  %1274 = vmatprep.subr.mxu0 0.0
  %1275 = vmatpush1.msra.mxu0 0.0
  %1276 = vmatprep.subr.mxu0 0.0
  %1277 = vmatpush1.msra.mxu0 0.0
  %1278 = vmatprep.subr.mxu0 0.0
  %1279 = vmatpush1.msra.mxu0 0.0
  %1280 = vmatprep.subr.mxu0 0.0
  %1281 = vmatpush1.msra.mxu0 0.0
  %1282 = vmatprep.subr.mxu0 0.0
  %1283 = vmatpush1.msra.mxu0 0.0
  %1284 = vmatprep.mubr.f32.mxu0 0.0
  %1285 = vmatmul.mubr.f32.gmra.mrb[0].mxu0 %v1123
  %v1286 = vpop.f32.mrb[0].mxu0
  %v1287 = vadd.f32 0.0, %v1286
  %v1288 = vpop.f32.mrb[0].mxu0
  %1289 = vmatprep.mubr.f32.mxu0 0.0
  %1290 = vmatmul.mubr.f32.gmra.mrb[0].mxu0 %v1125
  %v1291 = vpop.f32.mrb[0].mxu0
  %v1292 = vadd.f32 0.0, %v1291
  %v1293 = vpop.f32.mrb[0].mxu0
  %1294 = vmatprep.mubr.f32.mxu0 0.0
  %1295 = vmatmul.mubr.f32.gmra.mrb[0].mxu0 %v1127
  %v1296 = vpop.f32.mrb[0].mxu0
  %v1297 = vadd.f32 0.0, %v1296
  %v1298 = vpop.f32.mrb[0].mxu0
  %1299 = vmatprep.mubr.f32.mxu0 0.0
  %1300 = vmatmul.mubr.f32.gmra.mrb[0].mxu0 %v1129
  %v1301 = vpop.f32.mrb[0].mxu0
  %v1302 = vadd.f32 0.0, %v1301
  %v1303 = vpop.f32.mrb[0].mxu0
  %1304 = vdwg.mxu0
  %v1305 = vadd.f32 %v294, %v1287
  %v1306 = vadd.f32 %v299, %v1292
  %v1307 = vadd.f32 %v304, %v1297
  %v1308 = vadd.f32 %v309, %v1302
  %v1309 = vxor.u32 %v1305, 2147483648
  %v1310 = vxor.u32 %v1306, 2147483648
  %v1311 = vxor.u32 %v1307, 2147483648
  %v1312 = vxor.u32 %v1308, 2147483648
  %v1313 = vmul.f32 %v1309, 1.442695
  %v1314 = vpow.pop %v1313
  %v1315 = vmul.f32 %v1310, 1.442695
  %v1316 = vpow.pop %v1315
  %v1317 = vmul.f32 %v1311, 1.442695
  %v1318 = vpow.pop %v1317
  %v1319 = vmul.f32 %v1312, 1.442695
  %v1320 = vpow.pop %v1319
  %v1321 = vadd.f32 %v1314, 1.0
  %v1322 = vadd.f32 %v1316, 1.0
  %v1323 = vadd.f32 %v1318, 1.0
  %v1324 = vadd.f32 %v1320, 1.0
  %v1325 = vrcp.pop %v1321
  %v1326 = vmul.f32 1.0, %v1325
  %v1327 = vrcp.pop %v1322
  %v1328 = vmul.f32 1.0, %v1327
  %v1329 = vrcp.pop %v1323
  %v1330 = vmul.f32 1.0, %v1329
  %v1331 = vrcp.pop %v1324
  %v1332 = vmul.f32 1.0, %v1331
  %v1333 = vadd.f32 %v1287, %v646
  %v1334 = vadd.f32 %v1292, %v646
  %v1335 = vadd.f32 %v1297, %v646
  %v1336 = vadd.f32 %v1302, %v646
  %1341 = vrot.lane.b32.xlu0 %v1333, 64
  %v1342 = vpop.permute.xlu0 %1341
  %1343 = vrot.lane.b32.xlu0 %v1334, 64
  %v1344 = vpop.permute.xlu0 %1343
  %1345 = vrot.lane.b32.xlu0 %v1335, 64
  %v1346 = vpop.permute.xlu0 %1345
  %1347 = vrot.lane.b32.xlu0 %v1336, 64
  %v1348 = vpop.permute.xlu0 %1347
  %v1353 = vmul.f32 %v1326, %v1342
  %v1354 = vmul.f32 %v1328, %v1344
  %v1355 = vmul.f32 %v1330, %v1346
  %v1356 = vmul.f32 %v1332, %v1348
  %1361 = vrot.lane.b32.xlu0 %v1353, 64
  %v1362 = vpop.permute.xlu0 %1361
  %1363 = vrot.lane.b32.xlu0 %v1354, 64
  %v1364 = vpop.permute.xlu0 %1363
  %1365 = vrot.lane.b32.xlu0 %v1355, 64
  %v1366 = vpop.permute.xlu0 %1365
  %1367 = vrot.lane.b32.xlu0 %v1356, 64
  %v1368 = vpop.permute.xlu0 %1367
  %v1373 = vadd.f32 %v294, %v1362
  %v1374 = vadd.f32 %v299, %v1364
  %v1375 = vadd.f32 %v304, %v1366
  %v1376 = vadd.f32 %v309, %v1368
  %v1377 = vtanh.pop %v1373
  %v1378 = vtanh.pop %v1374
  %v1379 = vtanh.pop %v1375
  %v1380 = vtanh.pop %v1376
  %v1381 = vsub.f32 1.0, %v1326
  %v1382 = vsub.f32 1.0, %v1328
  %v1383 = vsub.f32 1.0, %v1330
  %v1384 = vsub.f32 1.0, %v1332
  %1389 = vrot.lane.b32.xlu0 %v1377, 96
  %v1390 = vpop.permute.xlu0 %1389
  %1391 = vrot.lane.b32.xlu0 %v1378, 96
  %v1392 = vpop.permute.xlu0 %1391
  %1393 = vrot.lane.b32.xlu0 %v1379, 96
  %v1394 = vpop.permute.xlu0 %1393
  %1395 = vrot.lane.b32.xlu0 %v1380, 96
  %v1396 = vpop.permute.xlu0 %1395
  %v1401 = vmul.f32 %v1381, %v1390
  %v1402 = vmul.f32 %v1382, %v1392
  %v1403 = vmul.f32 %v1383, %v1394
  %v1404 = vmul.f32 %v1384, %v1396
  %v1405 = vmul.f32 %v1326, %v1107
  %v1406 = vmul.f32 %v1328, %v1108
  %v1407 = vmul.f32 %v1330, %v1109
  %v1408 = vmul.f32 %v1332, %v1110
  %v1409 = vadd.f32 %v1401, %v1405
  %v1410 = vadd.f32 %v1402, %v1406
  %v1411 = vadd.f32 %v1403, %v1407
  %v1412 = vadd.f32 %v1404, %v1408
  %1417 = vrot.lane.b32.xlu0 %v1409, 96
  %v1418 = vpop.permute.xlu0 %1417
  %1419 = vrot.lane.b32.xlu0 %v1410, 96
  %v1420 = vpop.permute.xlu0 %1419
  %1421 = vrot.lane.b32.xlu0 %v1411, 96
  %v1422 = vpop.permute.xlu0 %1421
  %1423 = vrot.lane.b32.xlu0 %v1412, 96
  %v1424 = vpop.permute.xlu0 %1423
  %v1425 = vsel %vm523, %v1418, 0
  %v1427 = vsel %vm523, %v1420, 0
  %v1429 = vsel %vm523, %v1422, 0
  %v1431 = vsel %vm523, %v1424, 0
  %1433 = vmatprep.subr.mxu0 0.0
  %1434 = vmatpush1.msra.mxu0 %v409
  %1435 = vmatprep.subr.mxu0 0.0
  %1436 = vmatpush1.msra.mxu0 %v410
  %1437 = vmatprep.subr.mxu0 0.0
  %1438 = vmatpush1.msra.mxu0 %v411
  %1439 = vmatprep.subr.mxu0 0.0
  %1440 = vmatpush1.msra.mxu0 %v412
  %1441 = vmatprep.subr.mxu0 0.0
  %1442 = vmatpush1.msra.mxu0 0.0
  %1443 = vmatprep.subr.mxu0 0.0
  %1444 = vmatpush1.msra.mxu0 0.0
  %1445 = vmatprep.subr.mxu0 0.0
  %1446 = vmatpush1.msra.mxu0 0.0
  %1447 = vmatprep.subr.mxu0 0.0
  %1448 = vmatpush1.msra.mxu0 0.0
  %1449 = vmatprep.subr.mxu0 0.0
  %1450 = vmatpush1.msra.mxu0 0.0
  %1451 = vmatprep.subr.mxu0 0.0
  %1452 = vmatpush1.msra.mxu0 0.0
  %1453 = vmatprep.subr.mxu0 0.0
  %1454 = vmatpush1.msra.mxu0 0.0
  %1455 = vmatprep.subr.mxu0 0.0
  %1456 = vmatpush1.msra.mxu0 0.0
  %1457 = vmatprep.subr.mxu0 0.0
  %1458 = vmatpush1.msra.mxu0 0.0
  %1459 = vmatprep.subr.mxu0 0.0
  %1460 = vmatpush1.msra.mxu0 0.0
  %1461 = vmatprep.subr.mxu0 0.0
  %1462 = vmatpush1.msra.mxu0 0.0
  %1463 = vmatprep.subr.mxu0 0.0
  %1464 = vmatpush1.msra.mxu0 0.0
  %1465 = vmatprep.subr.mxu0 0.0
  %1466 = vmatpush1.msra.mxu0 0.0
  %1467 = vmatprep.subr.mxu0 0.0
  %1468 = vmatpush1.msra.mxu0 0.0
  %1469 = vmatprep.subr.mxu0 0.0
  %1470 = vmatpush1.msra.mxu0 0.0
  %1471 = vmatprep.subr.mxu0 0.0
  %1472 = vmatpush1.msra.mxu0 0.0
  %1473 = vmatprep.subr.mxu0 0.0
  %1474 = vmatpush1.msra.mxu0 0.0
  %1475 = vmatprep.subr.mxu0 0.0
  %1476 = vmatpush1.msra.mxu0 0.0
  %1477 = vmatprep.subr.mxu0 0.0
  %1478 = vmatpush1.msra.mxu0 0.0
  %1479 = vmatprep.subr.mxu0 0.0
  %1480 = vmatpush1.msra.mxu0 0.0
  %1481 = vmatprep.subr.mxu0 0.0
  %1482 = vmatpush1.msra.mxu0 0.0
  %1483 = vmatprep.subr.mxu0 0.0
  %1484 = vmatpush1.msra.mxu0 0.0
  %1485 = vmatprep.subr.mxu0 0.0
  %1486 = vmatpush1.msra.mxu0 0.0
  %1487 = vmatprep.subr.mxu0 0.0
  %1488 = vmatpush1.msra.mxu0 0.0
  %1489 = vmatprep.subr.mxu0 0.0
  %1490 = vmatpush1.msra.mxu0 0.0
  %1491 = vmatprep.subr.mxu0 0.0
  %1492 = vmatpush1.msra.mxu0 0.0
  %1493 = vmatprep.subr.mxu0 0.0
  %1494 = vmatpush1.msra.mxu0 0.0
  %1495 = vmatprep.subr.mxu0 0.0
  %1496 = vmatpush1.msra.mxu0 0.0
  %1497 = vmatprep.mubr.f32.mxu0 0.0
  %1498 = vmatmul.mubr.f32.gmra.mrb[0].mxu0 %v1425
  %v1499 = vpop.f32.mrb[0].mxu0
  %v1500 = vadd.f32 0.0, %v1499
  %v1501 = vpop.f32.mrb[0].mxu0
  %1502 = vmatprep.mubr.f32.mxu0 0.0
  %1503 = vmatmul.mubr.f32.gmra.mrb[0].mxu0 %v1427
  %v1504 = vpop.f32.mrb[0].mxu0
  %v1505 = vadd.f32 0.0, %v1504
  %v1506 = vpop.f32.mrb[0].mxu0
  %1507 = vmatprep.mubr.f32.mxu0 0.0
  %1508 = vmatmul.mubr.f32.gmra.mrb[0].mxu0 %v1429
  %v1509 = vpop.f32.mrb[0].mxu0
  %v1510 = vadd.f32 0.0, %v1509
  %v1511 = vpop.f32.mrb[0].mxu0
  %1512 = vmatprep.mubr.f32.mxu0 0.0
  %1513 = vmatmul.mubr.f32.gmra.mrb[0].mxu0 %v1431
  %v1514 = vpop.f32.mrb[0].mxu0
  %v1515 = vadd.f32 0.0, %v1514
  %v1516 = vpop.f32.mrb[0].mxu0
  %1517 = vdwg.mxu0
  %v1518 = vadd.f32 %v1216, %v1500
  %v1519 = vadd.f32 %v1217, %v1505
  %v1520 = vadd.f32 %v1218, %v1510
  %v1521 = vadd.f32 %v1219, %v1515
  %1522 = vmatprep.subr.mxu0 0.0
  %1523 = vmatpush1.msra.mxu0 %v392
  %1524 = vmatprep.subr.mxu0 0.0
  %1525 = vmatpush1.msra.mxu0 %v393
  %1526 = vmatprep.subr.mxu0 0.0
  %1527 = vmatpush1.msra.mxu0 %v394
  %1528 = vmatprep.subr.mxu0 0.0
  %1529 = vmatpush1.msra.mxu0 %v395
  %1530 = vmatprep.subr.mxu0 0.0
  %1531 = vmatpush1.msra.mxu0 0.0
  %1532 = vmatprep.subr.mxu0 0.0
  %1533 = vmatpush1.msra.mxu0 0.0
  %1534 = vmatprep.subr.mxu0 0.0
  %1535 = vmatpush1.msra.mxu0 0.0
  %1536 = vmatprep.subr.mxu0 0.0
  %1537 = vmatpush1.msra.mxu0 0.0
  %1538 = vmatprep.subr.mxu0 0.0
  %1539 = vmatpush1.msra.mxu0 0.0
  %1540 = vmatprep.subr.mxu0 0.0
  %1541 = vmatpush1.msra.mxu0 0.0
  %1542 = vmatprep.subr.mxu0 0.0
  %1543 = vmatpush1.msra.mxu0 0.0
  %1544 = vmatprep.subr.mxu0 0.0
  %1545 = vmatpush1.msra.mxu0 0.0
  %1546 = vmatprep.subr.mxu0 0.0
  %1547 = vmatpush1.msra.mxu0 0.0
  %1548 = vmatprep.subr.mxu0 0.0
  %1549 = vmatpush1.msra.mxu0 0.0
  %1550 = vmatprep.subr.mxu0 0.0
  %1551 = vmatpush1.msra.mxu0 0.0
  %1552 = vmatprep.subr.mxu0 0.0
  %1553 = vmatpush1.msra.mxu0 0.0
  %1554 = vmatprep.subr.mxu0 0.0
  %1555 = vmatpush1.msra.mxu0 0.0
  %1556 = vmatprep.subr.mxu0 0.0
  %1557 = vmatpush1.msra.mxu0 0.0
  %1558 = vmatprep.subr.mxu0 0.0
  %1559 = vmatpush1.msra.mxu0 0.0
  %1560 = vmatprep.subr.mxu0 0.0
  %1561 = vmatpush1.msra.mxu0 0.0
  %1562 = vmatprep.subr.mxu0 0.0
  %1563 = vmatpush1.msra.mxu0 0.0
  %1564 = vmatprep.subr.mxu0 0.0
  %1565 = vmatpush1.msra.mxu0 0.0
  %1566 = vmatprep.subr.mxu0 0.0
  %1567 = vmatpush1.msra.mxu0 0.0
  %1568 = vmatprep.subr.mxu0 0.0
  %1569 = vmatpush1.msra.mxu0 0.0
  %1570 = vmatprep.subr.mxu0 0.0
  %1571 = vmatpush1.msra.mxu0 0.0
  %1572 = vmatprep.subr.mxu0 0.0
  %1573 = vmatpush1.msra.mxu0 0.0
  %1574 = vmatprep.subr.mxu0 0.0
  %1575 = vmatpush1.msra.mxu0 0.0
  %1576 = vmatprep.subr.mxu0 0.0
  %1577 = vmatpush1.msra.mxu0 0.0
  %1578 = vmatprep.subr.mxu0 0.0
  %1579 = vmatpush1.msra.mxu0 0.0
  %1580 = vmatprep.subr.mxu0 0.0
  %1581 = vmatpush1.msra.mxu0 0.0
  %1582 = vmatprep.subr.mxu0 0.0
  %1583 = vmatpush1.msra.mxu0 0.0
  %1584 = vmatprep.subr.mxu0 0.0
  %1585 = vmatpush1.msra.mxu0 0.0
  %1586 = vmatprep.mubr.f32.mxu0 0.0
  %1587 = vmatmul.mubr.f32.gmra.mrb[0].mxu0 %v1425
  %v1588 = vpop.f32.mrb[0].mxu0
  %v1589 = vadd.f32 0.0, %v1588
  %v1590 = vpop.f32.mrb[0].mxu0
  %1591 = vmatprep.mubr.f32.mxu0 0.0
  %1592 = vmatmul.mubr.f32.gmra.mrb[0].mxu0 %v1427
  %v1593 = vpop.f32.mrb[0].mxu0
  %v1594 = vadd.f32 0.0, %v1593
  %v1595 = vpop.f32.mrb[0].mxu0
  %1596 = vmatprep.mubr.f32.mxu0 0.0
  %1597 = vmatmul.mubr.f32.gmra.mrb[0].mxu0 %v1429
  %v1598 = vpop.f32.mrb[0].mxu0
  %v1599 = vadd.f32 0.0, %v1598
  %v1600 = vpop.f32.mrb[0].mxu0
  %1601 = vmatprep.mubr.f32.mxu0 0.0
  %1602 = vmatmul.mubr.f32.gmra.mrb[0].mxu0 %v1431
  %v1603 = vpop.f32.mrb[0].mxu0
  %v1604 = vadd.f32 0.0, %v1603
  %v1605 = vpop.f32.mrb[0].mxu0
  %1606 = vdwg.mxu0
  %v1607 = vadd.f32 %v314, %v1589
  %v1608 = vadd.f32 %v319, %v1594
  %v1609 = vadd.f32 %v324, %v1599
  %v1610 = vadd.f32 %v329, %v1604
  %v1611 = vxor.u32 %v1607, 2147483648
  %v1612 = vxor.u32 %v1608, 2147483648
  %v1613 = vxor.u32 %v1609, 2147483648
  %v1614 = vxor.u32 %v1610, 2147483648
  %v1615 = vmul.f32 %v1611, 1.442695
  %v1616 = vpow.pop %v1615
  %v1617 = vmul.f32 %v1612, 1.442695
  %v1618 = vpow.pop %v1617
  %v1619 = vmul.f32 %v1613, 1.442695
  %v1620 = vpow.pop %v1619
  %v1621 = vmul.f32 %v1614, 1.442695
  %v1622 = vpow.pop %v1621
  %v1623 = vadd.f32 %v1616, 1.0
  %v1624 = vadd.f32 %v1618, 1.0
  %v1625 = vadd.f32 %v1620, 1.0
  %v1626 = vadd.f32 %v1622, 1.0
  %v1627 = vrcp.pop %v1623
  %v1628 = vmul.f32 1.0, %v1627
  %v1629 = vrcp.pop %v1624
  %v1630 = vmul.f32 1.0, %v1629
  %v1631 = vrcp.pop %v1625
  %v1632 = vmul.f32 1.0, %v1631
  %v1633 = vrcp.pop %v1626
  %v1634 = vmul.f32 1.0, %v1633
  %v1635 = vadd.f32 %v1589, %v646
  %v1636 = vadd.f32 %v1594, %v646
  %v1637 = vadd.f32 %v1599, %v646
  %v1638 = vadd.f32 %v1604, %v646
  %1643 = vrot.lane.b32.xlu0 %v1635, 64
  %v1644 = vpop.permute.xlu0 %1643
  %1645 = vrot.lane.b32.xlu0 %v1636, 64
  %v1646 = vpop.permute.xlu0 %1645
  %1647 = vrot.lane.b32.xlu0 %v1637, 64
  %v1648 = vpop.permute.xlu0 %1647
  %1649 = vrot.lane.b32.xlu0 %v1638, 64
  %v1650 = vpop.permute.xlu0 %1649
  %v1655 = vmul.f32 %v1628, %v1644
  %v1656 = vmul.f32 %v1630, %v1646
  %v1657 = vmul.f32 %v1632, %v1648
  %v1658 = vmul.f32 %v1634, %v1650
  %1663 = vrot.lane.b32.xlu0 %v1655, 64
  %v1664 = vpop.permute.xlu0 %1663
  %1665 = vrot.lane.b32.xlu0 %v1656, 64
  %v1666 = vpop.permute.xlu0 %1665
  %1667 = vrot.lane.b32.xlu0 %v1657, 64
  %v1668 = vpop.permute.xlu0 %1667
  %1669 = vrot.lane.b32.xlu0 %v1658, 64
  %v1670 = vpop.permute.xlu0 %1669
  %v1675 = vadd.f32 %v314, %v1664
  %v1676 = vadd.f32 %v319, %v1666
  %v1677 = vadd.f32 %v324, %v1668
  %v1678 = vadd.f32 %v329, %v1670
  %v1679 = vtanh.pop %v1675
  %v1680 = vtanh.pop %v1676
  %v1681 = vtanh.pop %v1677
  %v1682 = vtanh.pop %v1678
  %v1683 = vsub.f32 1.0, %v1628
  %v1684 = vsub.f32 1.0, %v1630
  %v1685 = vsub.f32 1.0, %v1632
  %v1686 = vsub.f32 1.0, %v1634
  %1691 = vrot.lane.b32.xlu0 %v1679, 96
  %v1692 = vpop.permute.xlu0 %1691
  %1693 = vrot.lane.b32.xlu0 %v1680, 96
  %v1694 = vpop.permute.xlu0 %1693
  %1695 = vrot.lane.b32.xlu0 %v1681, 96
  %v1696 = vpop.permute.xlu0 %1695
  %1697 = vrot.lane.b32.xlu0 %v1682, 96
  %v1698 = vpop.permute.xlu0 %1697
  %v1703 = vmul.f32 %v1683, %v1692
  %v1704 = vmul.f32 %v1684, %v1694
  %v1705 = vmul.f32 %v1685, %v1696
  %v1706 = vmul.f32 %v1686, %v1698
  %v1707 = vmul.f32 %v1628, %v1409
  %v1708 = vmul.f32 %v1630, %v1410
  %v1709 = vmul.f32 %v1632, %v1411
  %v1710 = vmul.f32 %v1634, %v1412
  %v1711 = vadd.f32 %v1703, %v1707
  %v1712 = vadd.f32 %v1704, %v1708
  %v1713 = vadd.f32 %v1705, %v1709
  %v1714 = vadd.f32 %v1706, %v1710
  %1719 = vrot.lane.b32.xlu0 %v1711, 96
  %v1720 = vpop.permute.xlu0 %1719
  %1721 = vrot.lane.b32.xlu0 %v1712, 96
  %v1722 = vpop.permute.xlu0 %1721
  %1723 = vrot.lane.b32.xlu0 %v1713, 96
  %v1724 = vpop.permute.xlu0 %1723
  %1725 = vrot.lane.b32.xlu0 %v1714, 96
  %v1726 = vpop.permute.xlu0 %1725
  %v1727 = vsel %vm523, %v1720, 0
  %v1729 = vsel %vm523, %v1722, 0
  %v1731 = vsel %vm523, %v1724, 0
  %v1733 = vsel %vm523, %v1726, 0
  %1735 = vmatprep.subr.mxu0 0.0
  %1736 = vmatpush1.msra.mxu0 %v413
  %1737 = vmatprep.subr.mxu0 0.0
  %1738 = vmatpush1.msra.mxu0 %v414
  %1739 = vmatprep.subr.mxu0 0.0
  %1740 = vmatpush1.msra.mxu0 %v415
  %1741 = vmatprep.subr.mxu0 0.0
  %1742 = vmatpush1.msra.mxu0 %v416
  %1743 = vmatprep.subr.mxu0 0.0
  %1744 = vmatpush1.msra.mxu0 0.0
  %1745 = vmatprep.subr.mxu0 0.0
  %1746 = vmatpush1.msra.mxu0 0.0
  %1747 = vmatprep.subr.mxu0 0.0
  %1748 = vmatpush1.msra.mxu0 0.0
  %1749 = vmatprep.subr.mxu0 0.0
  %1750 = vmatpush1.msra.mxu0 0.0
  %1751 = vmatprep.subr.mxu0 0.0
  %1752 = vmatpush1.msra.mxu0 0.0
  %1753 = vmatprep.subr.mxu0 0.0
  %1754 = vmatpush1.msra.mxu0 0.0
  %1755 = vmatprep.subr.mxu0 0.0
  %1756 = vmatpush1.msra.mxu0 0.0
  %1757 = vmatprep.subr.mxu0 0.0
  %1758 = vmatpush1.msra.mxu0 0.0
  %1759 = vmatprep.subr.mxu0 0.0
  %1760 = vmatpush1.msra.mxu0 0.0
  %1761 = vmatprep.subr.mxu0 0.0
  %1762 = vmatpush1.msra.mxu0 0.0
  %1763 = vmatprep.subr.mxu0 0.0
  %1764 = vmatpush1.msra.mxu0 0.0
  %1765 = vmatprep.subr.mxu0 0.0
  %1766 = vmatpush1.msra.mxu0 0.0
  %1767 = vmatprep.subr.mxu0 0.0
  %1768 = vmatpush1.msra.mxu0 0.0
  %1769 = vmatprep.subr.mxu0 0.0
  %1770 = vmatpush1.msra.mxu0 0.0
  %1771 = vmatprep.subr.mxu0 0.0
  %1772 = vmatpush1.msra.mxu0 0.0
  %1773 = vmatprep.subr.mxu0 0.0
  %1774 = vmatpush1.msra.mxu0 0.0
  %1775 = vmatprep.subr.mxu0 0.0
  %1776 = vmatpush1.msra.mxu0 0.0
  %1777 = vmatprep.subr.mxu0 0.0
  %1778 = vmatpush1.msra.mxu0 0.0
  %1779 = vmatprep.subr.mxu0 0.0
  %1780 = vmatpush1.msra.mxu0 0.0
  %1781 = vmatprep.subr.mxu0 0.0
  %1782 = vmatpush1.msra.mxu0 0.0
  %1783 = vmatprep.subr.mxu0 0.0
  %1784 = vmatpush1.msra.mxu0 0.0
  %1785 = vmatprep.subr.mxu0 0.0
  %1786 = vmatpush1.msra.mxu0 0.0
  %1787 = vmatprep.subr.mxu0 0.0
  %1788 = vmatpush1.msra.mxu0 0.0
  %1789 = vmatprep.subr.mxu0 0.0
  %1790 = vmatpush1.msra.mxu0 0.0
  %1791 = vmatprep.subr.mxu0 0.0
  %1792 = vmatpush1.msra.mxu0 0.0
  %1793 = vmatprep.subr.mxu0 0.0
  %1794 = vmatpush1.msra.mxu0 0.0
  %1795 = vmatprep.subr.mxu0 0.0
  %1796 = vmatpush1.msra.mxu0 0.0
  %1797 = vmatprep.subr.mxu0 0.0
  %1798 = vmatpush1.msra.mxu0 0.0
  %1799 = vmatprep.mubr.f32.mxu0 0.0
  %1800 = vmatmul.mubr.f32.gmra.mrb[0].mxu0 %v1727
  %v1801 = vpop.f32.mrb[0].mxu0
  %v1802 = vadd.f32 0.0, %v1801
  %v1803 = vpop.f32.mrb[0].mxu0
  %1804 = vmatprep.mubr.f32.mxu0 0.0
  %1805 = vmatmul.mubr.f32.gmra.mrb[0].mxu0 %v1729
  %v1806 = vpop.f32.mrb[0].mxu0
  %v1807 = vadd.f32 0.0, %v1806
  %v1808 = vpop.f32.mrb[0].mxu0
  %1809 = vmatprep.mubr.f32.mxu0 0.0
  %1810 = vmatmul.mubr.f32.gmra.mrb[0].mxu0 %v1731
  %v1811 = vpop.f32.mrb[0].mxu0
  %v1812 = vadd.f32 0.0, %v1811
  %v1813 = vpop.f32.mrb[0].mxu0
  %1814 = vmatprep.mubr.f32.mxu0 0.0
  %1815 = vmatmul.mubr.f32.gmra.mrb[0].mxu0 %v1733
  %v1816 = vpop.f32.mrb[0].mxu0
  %v1817 = vadd.f32 0.0, %v1816
  %v1818 = vpop.f32.mrb[0].mxu0
  %1819 = vdwg.mxu0
  %v1820 = vadd.f32 %v1518, %v1802
  %v1821 = vadd.f32 %v1519, %v1807
  %v1822 = vadd.f32 %v1520, %v1812
  %v1823 = vadd.f32 %v1521, %v1817
  %1824 = vmatprep.subr.mxu0 0.0
  %1825 = vmatpush1.msra.mxu0 %v392
  %1826 = vmatprep.subr.mxu0 0.0
  %1827 = vmatpush1.msra.mxu0 %v393
  %1828 = vmatprep.subr.mxu0 0.0
  %1829 = vmatpush1.msra.mxu0 %v394
  %1830 = vmatprep.subr.mxu0 0.0
  %1831 = vmatpush1.msra.mxu0 %v395
  %1832 = vmatprep.subr.mxu0 0.0
  %1833 = vmatpush1.msra.mxu0 0.0
  %1834 = vmatprep.subr.mxu0 0.0
  %1835 = vmatpush1.msra.mxu0 0.0
  %1836 = vmatprep.subr.mxu0 0.0
  %1837 = vmatpush1.msra.mxu0 0.0
  %1838 = vmatprep.subr.mxu0 0.0
  %1839 = vmatpush1.msra.mxu0 0.0
  %1840 = vmatprep.subr.mxu0 0.0
  %1841 = vmatpush1.msra.mxu0 0.0
  %1842 = vmatprep.subr.mxu0 0.0
  %1843 = vmatpush1.msra.mxu0 0.0
  %1844 = vmatprep.subr.mxu0 0.0
  %1845 = vmatpush1.msra.mxu0 0.0
  %1846 = vmatprep.subr.mxu0 0.0
  %1847 = vmatpush1.msra.mxu0 0.0
  %1848 = vmatprep.subr.mxu0 0.0
  %1849 = vmatpush1.msra.mxu0 0.0
  %1850 = vmatprep.subr.mxu0 0.0
  %1851 = vmatpush1.msra.mxu0 0.0
  %1852 = vmatprep.subr.mxu0 0.0
  %1853 = vmatpush1.msra.mxu0 0.0
  %1854 = vmatprep.subr.mxu0 0.0
  %1855 = vmatpush1.msra.mxu0 0.0
  %1856 = vmatprep.subr.mxu0 0.0
  %1857 = vmatpush1.msra.mxu0 0.0
  %1858 = vmatprep.subr.mxu0 0.0
  %1859 = vmatpush1.msra.mxu0 0.0
  %1860 = vmatprep.subr.mxu0 0.0
  %1861 = vmatpush1.msra.mxu0 0.0
  %1862 = vmatprep.subr.mxu0 0.0
  %1863 = vmatpush1.msra.mxu0 0.0
  %1864 = vmatprep.subr.mxu0 0.0
  %1865 = vmatpush1.msra.mxu0 0.0
  %1866 = vmatprep.subr.mxu0 0.0
  %1867 = vmatpush1.msra.mxu0 0.0
  %1868 = vmatprep.subr.mxu0 0.0
  %1869 = vmatpush1.msra.mxu0 0.0
  %1870 = vmatprep.subr.mxu0 0.0
  %1871 = vmatpush1.msra.mxu0 0.0
  %1872 = vmatprep.subr.mxu0 0.0
  %1873 = vmatpush1.msra.mxu0 0.0
  %1874 = vmatprep.subr.mxu0 0.0
  %1875 = vmatpush1.msra.mxu0 0.0
  %1876 = vmatprep.subr.mxu0 0.0
  %1877 = vmatpush1.msra.mxu0 0.0
  %1878 = vmatprep.subr.mxu0 0.0
  %1879 = vmatpush1.msra.mxu0 0.0
  %1880 = vmatprep.subr.mxu0 0.0
  %1881 = vmatpush1.msra.mxu0 0.0
  %1882 = vmatprep.subr.mxu0 0.0
  %1883 = vmatpush1.msra.mxu0 0.0
  %1884 = vmatprep.subr.mxu0 0.0
  %1885 = vmatpush1.msra.mxu0 0.0
  %1886 = vmatprep.subr.mxu0 0.0
  %1887 = vmatpush1.msra.mxu0 0.0
  %1888 = vmatprep.mubr.f32.mxu0 0.0
  %1889 = vmatmul.mubr.f32.gmra.mrb[0].mxu0 %v1727
  %v1890 = vpop.f32.mrb[0].mxu0
  %v1891 = vadd.f32 0.0, %v1890
  %v1892 = vpop.f32.mrb[0].mxu0
  %1893 = vmatprep.mubr.f32.mxu0 0.0
  %1894 = vmatmul.mubr.f32.gmra.mrb[0].mxu0 %v1729
  %v1895 = vpop.f32.mrb[0].mxu0
  %v1896 = vadd.f32 0.0, %v1895
  %v1897 = vpop.f32.mrb[0].mxu0
  %1898 = vmatprep.mubr.f32.mxu0 0.0
  %1899 = vmatmul.mubr.f32.gmra.mrb[0].mxu0 %v1731
  %v1900 = vpop.f32.mrb[0].mxu0
  %v1901 = vadd.f32 0.0, %v1900
  %v1902 = vpop.f32.mrb[0].mxu0
  %1903 = vmatprep.mubr.f32.mxu0 0.0
  %1904 = vmatmul.mubr.f32.gmra.mrb[0].mxu0 %v1733
  %v1905 = vpop.f32.mrb[0].mxu0
  %v1906 = vadd.f32 0.0, %v1905
  %v1907 = vpop.f32.mrb[0].mxu0
  %1908 = vdwg.mxu0
  %v1909 = vadd.f32 %v334, %v1891
  %v1910 = vadd.f32 %v339, %v1896
  %v1911 = vadd.f32 %v344, %v1901
  %v1912 = vadd.f32 %v349, %v1906
  %v1913 = vxor.u32 %v1909, 2147483648
  %v1914 = vxor.u32 %v1910, 2147483648
  %v1915 = vxor.u32 %v1911, 2147483648
  %v1916 = vxor.u32 %v1912, 2147483648
  %v1917 = vmul.f32 %v1913, 1.442695
  %v1918 = vpow.pop %v1917
  %v1919 = vmul.f32 %v1914, 1.442695
  %v1920 = vpow.pop %v1919
  %v1921 = vmul.f32 %v1915, 1.442695
  %v1922 = vpow.pop %v1921
  %v1923 = vmul.f32 %v1916, 1.442695
  %v1924 = vpow.pop %v1923
  %v1925 = vadd.f32 %v1918, 1.0
  %v1926 = vadd.f32 %v1920, 1.0
  %v1927 = vadd.f32 %v1922, 1.0
  %v1928 = vadd.f32 %v1924, 1.0
  %v1929 = vrcp.pop %v1925
  %v1930 = vmul.f32 1.0, %v1929
  %v1931 = vrcp.pop %v1926
  %v1932 = vmul.f32 1.0, %v1931
  %v1933 = vrcp.pop %v1927
  %v1934 = vmul.f32 1.0, %v1933
  %v1935 = vrcp.pop %v1928
  %v1936 = vmul.f32 1.0, %v1935
  %v1937 = vadd.f32 %v1891, %v646
  %v1938 = vadd.f32 %v1896, %v646
  %v1939 = vadd.f32 %v1901, %v646
  %v1940 = vadd.f32 %v1906, %v646
  %1945 = vrot.lane.b32.xlu0 %v1937, 64
  %v1946 = vpop.permute.xlu0 %1945
  %1947 = vrot.lane.b32.xlu0 %v1938, 64
  %v1948 = vpop.permute.xlu0 %1947
  %1949 = vrot.lane.b32.xlu0 %v1939, 64
  %v1950 = vpop.permute.xlu0 %1949
  %1951 = vrot.lane.b32.xlu0 %v1940, 64
  %v1952 = vpop.permute.xlu0 %1951
  %v1957 = vmul.f32 %v1930, %v1946
  %v1958 = vmul.f32 %v1932, %v1948
  %v1959 = vmul.f32 %v1934, %v1950
  %v1960 = vmul.f32 %v1936, %v1952
  %1965 = vrot.lane.b32.xlu0 %v1957, 64
  %v1966 = vpop.permute.xlu0 %1965
  %1967 = vrot.lane.b32.xlu0 %v1958, 64
  %v1968 = vpop.permute.xlu0 %1967
  %1969 = vrot.lane.b32.xlu0 %v1959, 64
  %v1970 = vpop.permute.xlu0 %1969
  %1971 = vrot.lane.b32.xlu0 %v1960, 64
  %v1972 = vpop.permute.xlu0 %1971
  %v1977 = vadd.f32 %v334, %v1966
  %v1978 = vadd.f32 %v339, %v1968
  %v1979 = vadd.f32 %v344, %v1970
  %v1980 = vadd.f32 %v349, %v1972
  %v1981 = vtanh.pop %v1977
  %v1982 = vtanh.pop %v1978
  %v1983 = vtanh.pop %v1979
  %v1984 = vtanh.pop %v1980
  %v1985 = vsub.f32 1.0, %v1930
  %v1986 = vsub.f32 1.0, %v1932
  %v1987 = vsub.f32 1.0, %v1934
  %v1988 = vsub.f32 1.0, %v1936
  %1993 = vrot.lane.b32.xlu0 %v1981, 96
  %v1994 = vpop.permute.xlu0 %1993
  %1995 = vrot.lane.b32.xlu0 %v1982, 96
  %v1996 = vpop.permute.xlu0 %1995
  %1997 = vrot.lane.b32.xlu0 %v1983, 96
  %v1998 = vpop.permute.xlu0 %1997
  %1999 = vrot.lane.b32.xlu0 %v1984, 96
  %v2000 = vpop.permute.xlu0 %1999
  %v2005 = vmul.f32 %v1985, %v1994
  %v2006 = vmul.f32 %v1986, %v1996
  %v2007 = vmul.f32 %v1987, %v1998
  %v2008 = vmul.f32 %v1988, %v2000
  %v2009 = vmul.f32 %v1930, %v1711
  %v2010 = vmul.f32 %v1932, %v1712
  %v2011 = vmul.f32 %v1934, %v1713
  %v2012 = vmul.f32 %v1936, %v1714
  %v2013 = vadd.f32 %v2005, %v2009
  %v2014 = vadd.f32 %v2006, %v2010
  %v2015 = vadd.f32 %v2007, %v2011
  %v2016 = vadd.f32 %v2008, %v2012
  %2021 = vrot.lane.b32.xlu0 %v2013, 96
  %v2022 = vpop.permute.xlu0 %2021
  %2023 = vrot.lane.b32.xlu0 %v2014, 96
  %v2024 = vpop.permute.xlu0 %2023
  %2025 = vrot.lane.b32.xlu0 %v2015, 96
  %v2026 = vpop.permute.xlu0 %2025
  %2027 = vrot.lane.b32.xlu0 %v2016, 96
  %v2028 = vpop.permute.xlu0 %2027
  %v2029 = vsel %vm523, %v2022, 0
  %v2031 = vsel %vm523, %v2024, 0
  %v2033 = vsel %vm523, %v2026, 0
  %v2035 = vsel %vm523, %v2028, 0
  %2037 = vmatprep.subr.mxu0 0.0
  %2038 = vmatpush1.msra.mxu0 %v417
  %2039 = vmatprep.subr.mxu0 0.0
  %2040 = vmatpush1.msra.mxu0 %v418
  %2041 = vmatprep.subr.mxu0 0.0
  %2042 = vmatpush1.msra.mxu0 %v419
  %2043 = vmatprep.subr.mxu0 0.0
  %2044 = vmatpush1.msra.mxu0 %v420
  %2045 = vmatprep.subr.mxu0 0.0
  %2046 = vmatpush1.msra.mxu0 0.0
  %2047 = vmatprep.subr.mxu0 0.0
  %2048 = vmatpush1.msra.mxu0 0.0
  %2049 = vmatprep.subr.mxu0 0.0
  %2050 = vmatpush1.msra.mxu0 0.0
  %2051 = vmatprep.subr.mxu0 0.0
  %2052 = vmatpush1.msra.mxu0 0.0
  %2053 = vmatprep.subr.mxu0 0.0
  %2054 = vmatpush1.msra.mxu0 0.0
  %2055 = vmatprep.subr.mxu0 0.0
  %2056 = vmatpush1.msra.mxu0 0.0
  %2057 = vmatprep.subr.mxu0 0.0
  %2058 = vmatpush1.msra.mxu0 0.0
  %2059 = vmatprep.subr.mxu0 0.0
  %2060 = vmatpush1.msra.mxu0 0.0
  %2061 = vmatprep.subr.mxu0 0.0
  %2062 = vmatpush1.msra.mxu0 0.0
  %2063 = vmatprep.subr.mxu0 0.0
  %2064 = vmatpush1.msra.mxu0 0.0
  %2065 = vmatprep.subr.mxu0 0.0
  %2066 = vmatpush1.msra.mxu0 0.0
  %2067 = vmatprep.subr.mxu0 0.0
  %2068 = vmatpush1.msra.mxu0 0.0
  %2069 = vmatprep.subr.mxu0 0.0
  %2070 = vmatpush1.msra.mxu0 0.0
  %2071 = vmatprep.subr.mxu0 0.0
  %2072 = vmatpush1.msra.mxu0 0.0
  %2073 = vmatprep.subr.mxu0 0.0
  %2074 = vmatpush1.msra.mxu0 0.0
  %2075 = vmatprep.subr.mxu0 0.0
  %2076 = vmatpush1.msra.mxu0 0.0
  %2077 = vmatprep.subr.mxu0 0.0
  %2078 = vmatpush1.msra.mxu0 0.0
  %2079 = vmatprep.subr.mxu0 0.0
  %2080 = vmatpush1.msra.mxu0 0.0
  %2081 = vmatprep.subr.mxu0 0.0
  %2082 = vmatpush1.msra.mxu0 0.0
  %2083 = vmatprep.subr.mxu0 0.0
  %2084 = vmatpush1.msra.mxu0 0.0
  %2085 = vmatprep.subr.mxu0 0.0
  %2086 = vmatpush1.msra.mxu0 0.0
  %2087 = vmatprep.subr.mxu0 0.0
  %2088 = vmatpush1.msra.mxu0 0.0
  %2089 = vmatprep.subr.mxu0 0.0
  %2090 = vmatpush1.msra.mxu0 0.0
  %2091 = vmatprep.subr.mxu0 0.0
  %2092 = vmatpush1.msra.mxu0 0.0
  %2093 = vmatprep.subr.mxu0 0.0
  %2094 = vmatpush1.msra.mxu0 0.0
  %2095 = vmatprep.subr.mxu0 0.0
  %2096 = vmatpush1.msra.mxu0 0.0
  %2097 = vmatprep.subr.mxu0 0.0
  %2098 = vmatpush1.msra.mxu0 0.0
  %2099 = vmatprep.subr.mxu0 0.0
  %2100 = vmatpush1.msra.mxu0 0.0
  %2101 = vmatprep.mubr.f32.mxu0 0.0
  %2102 = vmatmul.mubr.f32.gmra.mrb[0].mxu0 %v2029
  %v2103 = vpop.f32.mrb[0].mxu0
  %v2104 = vadd.f32 0.0, %v2103
  %v2105 = vpop.f32.mrb[0].mxu0
  %2106 = vmatprep.mubr.f32.mxu0 0.0
  %2107 = vmatmul.mubr.f32.gmra.mrb[0].mxu0 %v2031
  %v2108 = vpop.f32.mrb[0].mxu0
  %v2109 = vadd.f32 0.0, %v2108
  %v2110 = vpop.f32.mrb[0].mxu0
  %2111 = vmatprep.mubr.f32.mxu0 0.0
  %2112 = vmatmul.mubr.f32.gmra.mrb[0].mxu0 %v2033
  %v2113 = vpop.f32.mrb[0].mxu0
  %v2114 = vadd.f32 0.0, %v2113
  %v2115 = vpop.f32.mrb[0].mxu0
  %2116 = vmatprep.mubr.f32.mxu0 0.0
  %2117 = vmatmul.mubr.f32.gmra.mrb[0].mxu0 %v2035
  %v2118 = vpop.f32.mrb[0].mxu0
  %v2119 = vadd.f32 0.0, %v2118
  %v2120 = vpop.f32.mrb[0].mxu0
  %2121 = vdwg.mxu0
  %v2122 = vadd.f32 %v1820, %v2104
  %v2123 = vadd.f32 %v1821, %v2109
  %v2124 = vadd.f32 %v1822, %v2114
  %v2125 = vadd.f32 %v1823, %v2119
  %2126 = vmatprep.subr.mxu0 0.0
  %2127 = vmatpush1.msra.mxu0 %v392
  %2128 = vmatprep.subr.mxu0 0.0
  %2129 = vmatpush1.msra.mxu0 %v393
  %2130 = vmatprep.subr.mxu0 0.0
  %2131 = vmatpush1.msra.mxu0 %v394
  %2132 = vmatprep.subr.mxu0 0.0
  %2133 = vmatpush1.msra.mxu0 %v395
  %2134 = vmatprep.subr.mxu0 0.0
  %2135 = vmatpush1.msra.mxu0 0.0
  %2136 = vmatprep.subr.mxu0 0.0
  %2137 = vmatpush1.msra.mxu0 0.0
  %2138 = vmatprep.subr.mxu0 0.0
  %2139 = vmatpush1.msra.mxu0 0.0
  %2140 = vmatprep.subr.mxu0 0.0
  %2141 = vmatpush1.msra.mxu0 0.0
  %2142 = vmatprep.subr.mxu0 0.0
  %2143 = vmatpush1.msra.mxu0 0.0
  %2144 = vmatprep.subr.mxu0 0.0
  %2145 = vmatpush1.msra.mxu0 0.0
  %2146 = vmatprep.subr.mxu0 0.0
  %2147 = vmatpush1.msra.mxu0 0.0
  %2148 = vmatprep.subr.mxu0 0.0
  %2149 = vmatpush1.msra.mxu0 0.0
  %2150 = vmatprep.subr.mxu0 0.0
  %2151 = vmatpush1.msra.mxu0 0.0
  %2152 = vmatprep.subr.mxu0 0.0
  %2153 = vmatpush1.msra.mxu0 0.0
  %2154 = vmatprep.subr.mxu0 0.0
  %2155 = vmatpush1.msra.mxu0 0.0
  %2156 = vmatprep.subr.mxu0 0.0
  %2157 = vmatpush1.msra.mxu0 0.0
  %2158 = vmatprep.subr.mxu0 0.0
  %2159 = vmatpush1.msra.mxu0 0.0
  %2160 = vmatprep.subr.mxu0 0.0
  %2161 = vmatpush1.msra.mxu0 0.0
  %2162 = vmatprep.subr.mxu0 0.0
  %2163 = vmatpush1.msra.mxu0 0.0
  %2164 = vmatprep.subr.mxu0 0.0
  %2165 = vmatpush1.msra.mxu0 0.0
  %2166 = vmatprep.subr.mxu0 0.0
  %2167 = vmatpush1.msra.mxu0 0.0
  %2168 = vmatprep.subr.mxu0 0.0
  %2169 = vmatpush1.msra.mxu0 0.0
  %2170 = vmatprep.subr.mxu0 0.0
  %2171 = vmatpush1.msra.mxu0 0.0
  %2172 = vmatprep.subr.mxu0 0.0
  %2173 = vmatpush1.msra.mxu0 0.0
  %2174 = vmatprep.subr.mxu0 0.0
  %2175 = vmatpush1.msra.mxu0 0.0
  %2176 = vmatprep.subr.mxu0 0.0
  %2177 = vmatpush1.msra.mxu0 0.0
  %2178 = vmatprep.subr.mxu0 0.0
  %2179 = vmatpush1.msra.mxu0 0.0
  %2180 = vmatprep.subr.mxu0 0.0
  %2181 = vmatpush1.msra.mxu0 0.0
  %2182 = vmatprep.subr.mxu0 0.0
  %2183 = vmatpush1.msra.mxu0 0.0
  %2184 = vmatprep.subr.mxu0 0.0
  %2185 = vmatpush1.msra.mxu0 0.0
  %2186 = vmatprep.subr.mxu0 0.0
  %2187 = vmatpush1.msra.mxu0 0.0
  %2188 = vmatprep.subr.mxu0 0.0
  %2189 = vmatpush1.msra.mxu0 0.0
  %2190 = vmatprep.mubr.f32.mxu0 0.0
  %2191 = vmatmul.mubr.f32.gmra.mrb[0].mxu0 %v2029
  %v2192 = vpop.f32.mrb[0].mxu0
  %v2193 = vadd.f32 0.0, %v2192
  %v2194 = vpop.f32.mrb[0].mxu0
  %2195 = vmatprep.mubr.f32.mxu0 0.0
  %2196 = vmatmul.mubr.f32.gmra.mrb[0].mxu0 %v2031
  %v2197 = vpop.f32.mrb[0].mxu0
  %v2198 = vadd.f32 0.0, %v2197
  %v2199 = vpop.f32.mrb[0].mxu0
  %2200 = vmatprep.mubr.f32.mxu0 0.0
  %2201 = vmatmul.mubr.f32.gmra.mrb[0].mxu0 %v2033
  %v2202 = vpop.f32.mrb[0].mxu0
  %v2203 = vadd.f32 0.0, %v2202
  %v2204 = vpop.f32.mrb[0].mxu0
  %2205 = vmatprep.mubr.f32.mxu0 0.0
  %2206 = vmatmul.mubr.f32.gmra.mrb[0].mxu0 %v2035
  %v2207 = vpop.f32.mrb[0].mxu0
  %v2208 = vadd.f32 0.0, %v2207
  %v2209 = vpop.f32.mrb[0].mxu0
  %2210 = vdwg.mxu0
  %v2211 = vadd.f32 %v354, %v2193
  %v2212 = vadd.f32 %v359, %v2198
  %v2213 = vadd.f32 %v364, %v2203
  %v2214 = vadd.f32 %v369, %v2208
  %v2215 = vxor.u32 %v2211, 2147483648
  %v2216 = vxor.u32 %v2212, 2147483648
  %v2217 = vxor.u32 %v2213, 2147483648
  %v2218 = vxor.u32 %v2214, 2147483648
  %v2219 = vmul.f32 %v2215, 1.442695
  %v2220 = vpow.pop %v2219
  %v2221 = vmul.f32 %v2216, 1.442695
  %v2222 = vpow.pop %v2221
  %v2223 = vmul.f32 %v2217, 1.442695
  %v2224 = vpow.pop %v2223
  %v2225 = vmul.f32 %v2218, 1.442695
  %v2226 = vpow.pop %v2225
  %v2227 = vadd.f32 %v2220, 1.0
  %v2228 = vadd.f32 %v2222, 1.0
  %v2229 = vadd.f32 %v2224, 1.0
  %v2230 = vadd.f32 %v2226, 1.0
  %v2231 = vrcp.pop %v2227
  %v2232 = vmul.f32 1.0, %v2231
  %v2233 = vrcp.pop %v2228
  %v2234 = vmul.f32 1.0, %v2233
  %v2235 = vrcp.pop %v2229
  %v2236 = vmul.f32 1.0, %v2235
  %v2237 = vrcp.pop %v2230
  %v2238 = vmul.f32 1.0, %v2237
  %v2239 = vadd.f32 %v2193, %v646
  %v2240 = vadd.f32 %v2198, %v646
  %v2241 = vadd.f32 %v2203, %v646
  %v2242 = vadd.f32 %v2208, %v646
  %2247 = vrot.lane.b32.xlu0 %v2239, 64
  %v2248 = vpop.permute.xlu0 %2247
  %2249 = vrot.lane.b32.xlu0 %v2240, 64
  %v2250 = vpop.permute.xlu0 %2249
  %2251 = vrot.lane.b32.xlu0 %v2241, 64
  %v2252 = vpop.permute.xlu0 %2251
  %2253 = vrot.lane.b32.xlu0 %v2242, 64
  %v2254 = vpop.permute.xlu0 %2253
  %v2259 = vmul.f32 %v2232, %v2248
  %v2260 = vmul.f32 %v2234, %v2250
  %v2261 = vmul.f32 %v2236, %v2252
  %v2262 = vmul.f32 %v2238, %v2254
  %2267 = vrot.lane.b32.xlu0 %v2259, 64
  %v2268 = vpop.permute.xlu0 %2267
  %2269 = vrot.lane.b32.xlu0 %v2260, 64
  %v2270 = vpop.permute.xlu0 %2269
  %2271 = vrot.lane.b32.xlu0 %v2261, 64
  %v2272 = vpop.permute.xlu0 %2271
  %2273 = vrot.lane.b32.xlu0 %v2262, 64
  %v2274 = vpop.permute.xlu0 %2273
  %v2279 = vadd.f32 %v354, %v2268
  %v2280 = vadd.f32 %v359, %v2270
  %v2281 = vadd.f32 %v364, %v2272
  %v2282 = vadd.f32 %v369, %v2274
  %v2283 = vtanh.pop %v2279
  %v2284 = vtanh.pop %v2280
  %v2285 = vtanh.pop %v2281
  %v2286 = vtanh.pop %v2282
  %v2287 = vsub.f32 1.0, %v2232
  %v2288 = vsub.f32 1.0, %v2234
  %v2289 = vsub.f32 1.0, %v2236
  %v2290 = vsub.f32 1.0, %v2238
  %2295 = vrot.lane.b32.xlu0 %v2283, 96
  %v2296 = vpop.permute.xlu0 %2295
  %2297 = vrot.lane.b32.xlu0 %v2284, 96
  %v2298 = vpop.permute.xlu0 %2297
  %2299 = vrot.lane.b32.xlu0 %v2285, 96
  %v2300 = vpop.permute.xlu0 %2299
  %2301 = vrot.lane.b32.xlu0 %v2286, 96
  %v2302 = vpop.permute.xlu0 %2301
  %v2307 = vmul.f32 %v2287, %v2296
  %v2308 = vmul.f32 %v2288, %v2298
  %v2309 = vmul.f32 %v2289, %v2300
  %v2310 = vmul.f32 %v2290, %v2302
  %v2311 = vmul.f32 %v2232, %v2013
  %v2312 = vmul.f32 %v2234, %v2014
  %v2313 = vmul.f32 %v2236, %v2015
  %v2314 = vmul.f32 %v2238, %v2016
  %v2315 = vadd.f32 %v2307, %v2311
  %v2316 = vadd.f32 %v2308, %v2312
  %v2317 = vadd.f32 %v2309, %v2313
  %v2318 = vadd.f32 %v2310, %v2314
  %2323 = vrot.lane.b32.xlu0 %v2315, 96
  %v2324 = vpop.permute.xlu0 %2323
  %2325 = vrot.lane.b32.xlu0 %v2316, 96
  %v2326 = vpop.permute.xlu0 %2325
  %2327 = vrot.lane.b32.xlu0 %v2317, 96
  %v2328 = vpop.permute.xlu0 %2327
  %2329 = vrot.lane.b32.xlu0 %v2318, 96
  %v2330 = vpop.permute.xlu0 %2329
  %v2331 = vsel %vm523, %v2324, 0
  %v2333 = vsel %vm523, %v2326, 0
  %v2335 = vsel %vm523, %v2328, 0
  %v2337 = vsel %vm523, %v2330, 0
  %2339 = vmatprep.subr.mxu0 0.0
  %2340 = vmatpush1.msra.mxu0 %v421
  %2341 = vmatprep.subr.mxu0 0.0
  %2342 = vmatpush1.msra.mxu0 %v422
  %2343 = vmatprep.subr.mxu0 0.0
  %2344 = vmatpush1.msra.mxu0 %v423
  %2345 = vmatprep.subr.mxu0 0.0
  %2346 = vmatpush1.msra.mxu0 %v424
  %2347 = vmatprep.subr.mxu0 0.0
  %2348 = vmatpush1.msra.mxu0 0.0
  %2349 = vmatprep.subr.mxu0 0.0
  %2350 = vmatpush1.msra.mxu0 0.0
  %2351 = vmatprep.subr.mxu0 0.0
  %2352 = vmatpush1.msra.mxu0 0.0
  %2353 = vmatprep.subr.mxu0 0.0
  %2354 = vmatpush1.msra.mxu0 0.0
  %2355 = vmatprep.subr.mxu0 0.0
  %2356 = vmatpush1.msra.mxu0 0.0
  %2357 = vmatprep.subr.mxu0 0.0
  %2358 = vmatpush1.msra.mxu0 0.0
  %2359 = vmatprep.subr.mxu0 0.0
  %2360 = vmatpush1.msra.mxu0 0.0
  %2361 = vmatprep.subr.mxu0 0.0
  %2362 = vmatpush1.msra.mxu0 0.0
  %2363 = vmatprep.subr.mxu0 0.0
  %2364 = vmatpush1.msra.mxu0 0.0
  %2365 = vmatprep.subr.mxu0 0.0
  %2366 = vmatpush1.msra.mxu0 0.0
  %2367 = vmatprep.subr.mxu0 0.0
  %2368 = vmatpush1.msra.mxu0 0.0
  %2369 = vmatprep.subr.mxu0 0.0
  %2370 = vmatpush1.msra.mxu0 0.0
  %2371 = vmatprep.subr.mxu0 0.0
  %2372 = vmatpush1.msra.mxu0 0.0
  %2373 = vmatprep.subr.mxu0 0.0
  %2374 = vmatpush1.msra.mxu0 0.0
  %2375 = vmatprep.subr.mxu0 0.0
  %2376 = vmatpush1.msra.mxu0 0.0
  %2377 = vmatprep.subr.mxu0 0.0
  %2378 = vmatpush1.msra.mxu0 0.0
  %2379 = vmatprep.subr.mxu0 0.0
  %2380 = vmatpush1.msra.mxu0 0.0
  %2381 = vmatprep.subr.mxu0 0.0
  %2382 = vmatpush1.msra.mxu0 0.0
  %2383 = vmatprep.subr.mxu0 0.0
  %2384 = vmatpush1.msra.mxu0 0.0
  %2385 = vmatprep.subr.mxu0 0.0
  %2386 = vmatpush1.msra.mxu0 0.0
  %2387 = vmatprep.subr.mxu0 0.0
  %2388 = vmatpush1.msra.mxu0 0.0
  %2389 = vmatprep.subr.mxu0 0.0
  %2390 = vmatpush1.msra.mxu0 0.0
  %2391 = vmatprep.subr.mxu0 0.0
  %2392 = vmatpush1.msra.mxu0 0.0
  %2393 = vmatprep.subr.mxu0 0.0
  %2394 = vmatpush1.msra.mxu0 0.0
  %2395 = vmatprep.subr.mxu0 0.0
  %2396 = vmatpush1.msra.mxu0 0.0
  %2397 = vmatprep.subr.mxu0 0.0
  %2398 = vmatpush1.msra.mxu0 0.0
  %2399 = vmatprep.subr.mxu0 0.0
  %2400 = vmatpush1.msra.mxu0 0.0
  %2401 = vmatprep.subr.mxu0 0.0
  %2402 = vmatpush1.msra.mxu0 0.0
  %2403 = vmatprep.mubr.f32.mxu0 0.0
  %2404 = vmatmul.mubr.f32.gmra.mrb[0].mxu0 %v2331
  %v2405 = vpop.f32.mrb[0].mxu0
  %v2406 = vadd.f32 0.0, %v2405
  %v2407 = vpop.f32.mrb[0].mxu0
  %2408 = vmatprep.mubr.f32.mxu0 0.0
  %2409 = vmatmul.mubr.f32.gmra.mrb[0].mxu0 %v2333
  %v2410 = vpop.f32.mrb[0].mxu0
  %v2411 = vadd.f32 0.0, %v2410
  %v2412 = vpop.f32.mrb[0].mxu0
  %2413 = vmatprep.mubr.f32.mxu0 0.0
  %2414 = vmatmul.mubr.f32.gmra.mrb[0].mxu0 %v2335
  %v2415 = vpop.f32.mrb[0].mxu0
  %v2416 = vadd.f32 0.0, %v2415
  %v2417 = vpop.f32.mrb[0].mxu0
  %2418 = vmatprep.mubr.f32.mxu0 0.0
  %2419 = vmatmul.mubr.f32.gmra.mrb[0].mxu0 %v2337
  %v2420 = vpop.f32.mrb[0].mxu0
  %v2421 = vadd.f32 0.0, %v2420
  %v2422 = vpop.f32.mrb[0].mxu0
  %2423 = vdwg.mxu0
  %v2424 = vadd.f32 %v2122, %v2406
  %v2425 = vadd.f32 %v2123, %v2411
  %v2426 = vadd.f32 %v2124, %v2416
  %v2427 = vadd.f32 %v2125, %v2421
  %2428 = vmatprep.subr.mxu0 0.0
  %2429 = vmatpush1.msra.mxu0 %v392
  %2430 = vmatprep.subr.mxu0 0.0
  %2431 = vmatpush1.msra.mxu0 %v393
  %2432 = vmatprep.subr.mxu0 0.0
  %2433 = vmatpush1.msra.mxu0 %v394
  %2434 = vmatprep.subr.mxu0 0.0
  %2435 = vmatpush1.msra.mxu0 %v395
  %2436 = vmatprep.subr.mxu0 0.0
  %2437 = vmatpush1.msra.mxu0 0.0
  %2438 = vmatprep.subr.mxu0 0.0
  %2439 = vmatpush1.msra.mxu0 0.0
  %2440 = vmatprep.subr.mxu0 0.0
  %2441 = vmatpush1.msra.mxu0 0.0
  %2442 = vmatprep.subr.mxu0 0.0
  %2443 = vmatpush1.msra.mxu0 0.0
  %2444 = vmatprep.subr.mxu0 0.0
  %2445 = vmatpush1.msra.mxu0 0.0
  %2446 = vmatprep.subr.mxu0 0.0
  %2447 = vmatpush1.msra.mxu0 0.0
  %2448 = vmatprep.subr.mxu0 0.0
  %2449 = vmatpush1.msra.mxu0 0.0
  %2450 = vmatprep.subr.mxu0 0.0
  %2451 = vmatpush1.msra.mxu0 0.0
  %2452 = vmatprep.subr.mxu0 0.0
  %2453 = vmatpush1.msra.mxu0 0.0
  %2454 = vmatprep.subr.mxu0 0.0
  %2455 = vmatpush1.msra.mxu0 0.0
  %2456 = vmatprep.subr.mxu0 0.0
  %2457 = vmatpush1.msra.mxu0 0.0
  %2458 = vmatprep.subr.mxu0 0.0
  %2459 = vmatpush1.msra.mxu0 0.0
  %2460 = vmatprep.subr.mxu0 0.0
  %2461 = vmatpush1.msra.mxu0 0.0
  %2462 = vmatprep.subr.mxu0 0.0
  %2463 = vmatpush1.msra.mxu0 0.0
  %2464 = vmatprep.subr.mxu0 0.0
  %2465 = vmatpush1.msra.mxu0 0.0
  %2466 = vmatprep.subr.mxu0 0.0
  %2467 = vmatpush1.msra.mxu0 0.0
  %2468 = vmatprep.subr.mxu0 0.0
  %2469 = vmatpush1.msra.mxu0 0.0
  %2470 = vmatprep.subr.mxu0 0.0
  %2471 = vmatpush1.msra.mxu0 0.0
  %2472 = vmatprep.subr.mxu0 0.0
  %2473 = vmatpush1.msra.mxu0 0.0
  %2474 = vmatprep.subr.mxu0 0.0
  %2475 = vmatpush1.msra.mxu0 0.0
  %2476 = vmatprep.subr.mxu0 0.0
  %2477 = vmatpush1.msra.mxu0 0.0
  %2478 = vmatprep.subr.mxu0 0.0
  %2479 = vmatpush1.msra.mxu0 0.0
  %2480 = vmatprep.subr.mxu0 0.0
  %2481 = vmatpush1.msra.mxu0 0.0
  %2482 = vmatprep.subr.mxu0 0.0
  %2483 = vmatpush1.msra.mxu0 0.0
  %2484 = vmatprep.subr.mxu0 0.0
  %2485 = vmatpush1.msra.mxu0 0.0
  %2486 = vmatprep.subr.mxu0 0.0
  %2487 = vmatpush1.msra.mxu0 0.0
  %2488 = vmatprep.subr.mxu0 0.0
  %2489 = vmatpush1.msra.mxu0 0.0
  %2490 = vmatprep.subr.mxu0 0.0
  %2491 = vmatpush1.msra.mxu0 0.0
  %2492 = vmatprep.mubr.f32.mxu0 0.0
  %2493 = vmatmul.mubr.f32.gmra.mrb[0].mxu0 %v2331
  %v2494 = vpop.f32.mrb[0].mxu0
  %v2495 = vadd.f32 0.0, %v2494
  %v2496 = vpop.f32.mrb[0].mxu0
  %2497 = vmatprep.mubr.f32.mxu0 0.0
  %2498 = vmatmul.mubr.f32.gmra.mrb[0].mxu0 %v2333
  %v2499 = vpop.f32.mrb[0].mxu0
  %v2500 = vadd.f32 0.0, %v2499
  %v2501 = vpop.f32.mrb[0].mxu0
  %2502 = vmatprep.mubr.f32.mxu0 0.0
  %2503 = vmatmul.mubr.f32.gmra.mrb[0].mxu0 %v2335
  %v2504 = vpop.f32.mrb[0].mxu0
  %v2505 = vadd.f32 0.0, %v2504
  %v2506 = vpop.f32.mrb[0].mxu0
  %2507 = vmatprep.mubr.f32.mxu0 0.0
  %2508 = vmatmul.mubr.f32.gmra.mrb[0].mxu0 %v2337
  %v2509 = vpop.f32.mrb[0].mxu0
  %v2510 = vadd.f32 0.0, %v2509
  %v2511 = vpop.f32.mrb[0].mxu0
  %2512 = vdwg.mxu0
  %v2513 = vadd.f32 %v374, %v2495
  %v2514 = vadd.f32 %v379, %v2500
  %v2515 = vadd.f32 %v384, %v2505
  %v2516 = vadd.f32 %v389, %v2510
  %v2517 = vxor.u32 %v2513, 2147483648
  %v2518 = vxor.u32 %v2514, 2147483648
  %v2519 = vxor.u32 %v2515, 2147483648
  %v2520 = vxor.u32 %v2516, 2147483648
  %v2521 = vmul.f32 %v2517, 1.442695
  %v2522 = vpow.pop %v2521
  %v2523 = vmul.f32 %v2518, 1.442695
  %v2524 = vpow.pop %v2523
  %v2525 = vmul.f32 %v2519, 1.442695
  %v2526 = vpow.pop %v2525
  %v2527 = vmul.f32 %v2520, 1.442695
  %v2528 = vpow.pop %v2527
  %v2529 = vadd.f32 %v2522, 1.0
  %v2530 = vadd.f32 %v2524, 1.0
  %v2531 = vadd.f32 %v2526, 1.0
  %v2532 = vadd.f32 %v2528, 1.0
  %v2533 = vrcp.pop %v2529
  %v2534 = vmul.f32 1.0, %v2533
  %v2535 = vrcp.pop %v2530
  %v2536 = vmul.f32 1.0, %v2535
  %v2537 = vrcp.pop %v2531
  %v2538 = vmul.f32 1.0, %v2537
  %v2539 = vrcp.pop %v2532
  %v2540 = vmul.f32 1.0, %v2539
  %v2541 = vadd.f32 %v2495, %v646
  %v2542 = vadd.f32 %v2500, %v646
  %v2543 = vadd.f32 %v2505, %v646
  %v2544 = vadd.f32 %v2510, %v646
  %2549 = vrot.lane.b32.xlu0 %v2541, 64
  %v2550 = vpop.permute.xlu0 %2549
  %2551 = vrot.lane.b32.xlu0 %v2542, 64
  %v2552 = vpop.permute.xlu0 %2551
  %2553 = vrot.lane.b32.xlu0 %v2543, 64
  %v2554 = vpop.permute.xlu0 %2553
  %2555 = vrot.lane.b32.xlu0 %v2544, 64
  %v2556 = vpop.permute.xlu0 %2555
  %v2561 = vmul.f32 %v2534, %v2550
  %v2562 = vmul.f32 %v2536, %v2552
  %v2563 = vmul.f32 %v2538, %v2554
  %v2564 = vmul.f32 %v2540, %v2556
  %2569 = vrot.lane.b32.xlu0 %v2561, 64
  %v2570 = vpop.permute.xlu0 %2569
  %2571 = vrot.lane.b32.xlu0 %v2562, 64
  %v2572 = vpop.permute.xlu0 %2571
  %2573 = vrot.lane.b32.xlu0 %v2563, 64
  %v2574 = vpop.permute.xlu0 %2573
  %2575 = vrot.lane.b32.xlu0 %v2564, 64
  %v2576 = vpop.permute.xlu0 %2575
  %v2581 = vadd.f32 %v374, %v2570
  %v2582 = vadd.f32 %v379, %v2572
  %v2583 = vadd.f32 %v384, %v2574
  %v2584 = vadd.f32 %v389, %v2576
  %v2585 = vtanh.pop %v2581
  %v2586 = vtanh.pop %v2582
  %v2587 = vtanh.pop %v2583
  %v2588 = vtanh.pop %v2584
  %v2589 = vsub.f32 1.0, %v2534
  %v2590 = vsub.f32 1.0, %v2536
  %v2591 = vsub.f32 1.0, %v2538
  %v2592 = vsub.f32 1.0, %v2540
  %2597 = vrot.lane.b32.xlu0 %v2585, 96
  %v2598 = vpop.permute.xlu0 %2597
  %2599 = vrot.lane.b32.xlu0 %v2586, 96
  %v2600 = vpop.permute.xlu0 %2599
  %2601 = vrot.lane.b32.xlu0 %v2587, 96
  %v2602 = vpop.permute.xlu0 %2601
  %2603 = vrot.lane.b32.xlu0 %v2588, 96
  %v2604 = vpop.permute.xlu0 %2603
  %v2609 = vmul.f32 %v2589, %v2598
  %v2610 = vmul.f32 %v2590, %v2600
  %v2611 = vmul.f32 %v2591, %v2602
  %v2612 = vmul.f32 %v2592, %v2604
  %v2613 = vmul.f32 %v2534, %v2315
  %v2614 = vmul.f32 %v2536, %v2316
  %v2615 = vmul.f32 %v2538, %v2317
  %v2616 = vmul.f32 %v2540, %v2318
  %v2617 = vadd.f32 %v2609, %v2613
  %v2618 = vadd.f32 %v2610, %v2614
  %v2619 = vadd.f32 %v2611, %v2615
  %v2620 = vadd.f32 %v2612, %v2616
  %2625 = vrot.lane.b32.xlu0 %v2617, 96
  %v2626 = vpop.permute.xlu0 %2625
  %2627 = vrot.lane.b32.xlu0 %v2618, 96
  %v2628 = vpop.permute.xlu0 %2627
  %2629 = vrot.lane.b32.xlu0 %v2619, 96
  %v2630 = vpop.permute.xlu0 %2629
  %2631 = vrot.lane.b32.xlu0 %v2620, 96
  %v2632 = vpop.permute.xlu0 %2631
  %v2633 = vsel %vm523, %v2626, 0
  %v2635 = vsel %vm523, %v2628, 0
  %v2637 = vsel %vm523, %v2630, 0
  %v2639 = vsel %vm523, %v2632, 0
  %2641 = vmatprep.subr.mxu0 0.0
  %2642 = vmatpush1.msra.mxu0 %v425
  %2643 = vmatprep.subr.mxu0 0.0
  %2644 = vmatpush1.msra.mxu0 %v426
  %2645 = vmatprep.subr.mxu0 0.0
  %2646 = vmatpush1.msra.mxu0 %v427
  %2647 = vmatprep.subr.mxu0 0.0
  %2648 = vmatpush1.msra.mxu0 %v428
  %2649 = vmatprep.subr.mxu0 0.0
  %2650 = vmatpush1.msra.mxu0 0.0
  %2651 = vmatprep.subr.mxu0 0.0
  %2652 = vmatpush1.msra.mxu0 0.0
  %2653 = vmatprep.subr.mxu0 0.0
  %2654 = vmatpush1.msra.mxu0 0.0
  %2655 = vmatprep.subr.mxu0 0.0
  %2656 = vmatpush1.msra.mxu0 0.0
  %2657 = vmatprep.subr.mxu0 0.0
  %2658 = vmatpush1.msra.mxu0 0.0
  %2659 = vmatprep.subr.mxu0 0.0
  %2660 = vmatpush1.msra.mxu0 0.0
  %2661 = vmatprep.subr.mxu0 0.0
  %2662 = vmatpush1.msra.mxu0 0.0
  %2663 = vmatprep.subr.mxu0 0.0
  %2664 = vmatpush1.msra.mxu0 0.0
  %2665 = vmatprep.subr.mxu0 0.0
  %2666 = vmatpush1.msra.mxu0 0.0
  %2667 = vmatprep.subr.mxu0 0.0
  %2668 = vmatpush1.msra.mxu0 0.0
  %2669 = vmatprep.subr.mxu0 0.0
  %2670 = vmatpush1.msra.mxu0 0.0
  %2671 = vmatprep.subr.mxu0 0.0
  %2672 = vmatpush1.msra.mxu0 0.0
  %2673 = vmatprep.subr.mxu0 0.0
  %2674 = vmatpush1.msra.mxu0 0.0
  %2675 = vmatprep.subr.mxu0 0.0
  %2676 = vmatpush1.msra.mxu0 0.0
  %2677 = vmatprep.subr.mxu0 0.0
  %2678 = vmatpush1.msra.mxu0 0.0
  %2679 = vmatprep.subr.mxu0 0.0
  %2680 = vmatpush1.msra.mxu0 0.0
  %2681 = vmatprep.subr.mxu0 0.0
  %2682 = vmatpush1.msra.mxu0 0.0
  %2683 = vmatprep.subr.mxu0 0.0
  %2684 = vmatpush1.msra.mxu0 0.0
  %2685 = vmatprep.subr.mxu0 0.0
  %2686 = vmatpush1.msra.mxu0 0.0
  %2687 = vmatprep.subr.mxu0 0.0
  %2688 = vmatpush1.msra.mxu0 0.0
  %2689 = vmatprep.subr.mxu0 0.0
  %2690 = vmatpush1.msra.mxu0 0.0
  %2691 = vmatprep.subr.mxu0 0.0
  %2692 = vmatpush1.msra.mxu0 0.0
  %2693 = vmatprep.subr.mxu0 0.0
  %2694 = vmatpush1.msra.mxu0 0.0
  %2695 = vmatprep.subr.mxu0 0.0
  %2696 = vmatpush1.msra.mxu0 0.0
  %2697 = vmatprep.subr.mxu0 0.0
  %2698 = vmatpush1.msra.mxu0 0.0
  %2699 = vmatprep.subr.mxu0 0.0
  %2700 = vmatpush1.msra.mxu0 0.0
  %2701 = vmatprep.subr.mxu0 0.0
  %2702 = vmatpush1.msra.mxu0 0.0
  %2703 = vmatprep.subr.mxu0 0.0
  %2704 = vmatpush1.msra.mxu0 0.0
  %2705 = vmatprep.mubr.f32.mxu0 0.0
  %2706 = vmatmul.mubr.f32.gmra.mrb[0].mxu0 %v2633
  %v2707 = vpop.f32.mrb[0].mxu0
  %v2708 = vadd.f32 0.0, %v2707
  %v2709 = vpop.f32.mrb[0].mxu0
  %2710 = vmatprep.mubr.f32.mxu0 0.0
  %2711 = vmatmul.mubr.f32.gmra.mrb[0].mxu0 %v2635
  %v2712 = vpop.f32.mrb[0].mxu0
  %v2713 = vadd.f32 0.0, %v2712
  %v2714 = vpop.f32.mrb[0].mxu0
  %2715 = vmatprep.mubr.f32.mxu0 0.0
  %2716 = vmatmul.mubr.f32.gmra.mrb[0].mxu0 %v2637
  %v2717 = vpop.f32.mrb[0].mxu0
  %v2718 = vadd.f32 0.0, %v2717
  %v2719 = vpop.f32.mrb[0].mxu0
  %2720 = vmatprep.mubr.f32.mxu0 0.0
  %2721 = vmatmul.mubr.f32.gmra.mrb[0].mxu0 %v2639
  %v2722 = vpop.f32.mrb[0].mxu0
  %v2723 = vadd.f32 0.0, %v2722
  %v2724 = vpop.f32.mrb[0].mxu0
  %2725 = vdwg.mxu0
  %v2726 = vadd.f32 %v2424, %v2708
  %v2727 = vadd.f32 %v2425, %v2713
  %v2728 = vadd.f32 %v2426, %v2718
  %v2729 = vadd.f32 %v2427, %v2723
  %v2730 = vld [vmem:[%s6] sm:$0x1]
  %v2732 = vlaneseq
  %v2733 = vshrl.u32 %v2732, 7
  %v2734 = vsub.s32 0, %v2733
  %v2735 = vrot.slane %v2730, %v2734
  %v2737 = vadd.f32 %v2726, %v2735
  %v2738 = vadd.f32 %v2727, %v2735
  %v2739 = vadd.f32 %v2728, %v2735
  %v2740 = vadd.f32 %v2729, %v2735
  %vm2741 = vcmask 97280
  %2742 = vst.msk [vmem:[%s7] sm:$0xff] %vm2741, %v2737
  %2743 = vst.msk [vmem:[%s7 + $0x8] sm:$0xff] %vm2741, %v2738
  %2744 = vst.msk [vmem:[%s7 + $0x10] sm:$0xff] %vm2741, %v2739
  %2745 = vst.msk [vmem:[%s7 + $0x18] sm:$0xff] %vm2741, %v2740
  // Predicated region
  $region30: #{gru_module_forward.1} parent=0 // pred_check
    _
  $region31: #{gru_module_forward.1} parent=0 // pred_check_branch
    %2747 = sbr.rel (0) target = $region33
  $region32: #{gru_module_forward.1} parent=0 // pred_region
    _
  $region33: #{gru_module_forward.1} parent=0 // pred_fallthru
    _
  // Predicated region
  $region34: #{gru_module_forward.1} parent=0 // pred_check
    _
  $region35: #{gru_module_forward.1} parent=0 // pred_check_branch
    %2749 = sbr.rel (0) target = $region37
  $region36: #{gru_module_forward.1} parent=0 // pred_region
    _
  $region37: #{gru_module_forward.1} parent=0 // pred_fallthru
    _

</llo_original>
